<compile_context>
chip_gen: v7x
topology: tpu7x:2x2x1
jax: 0.10.0
libtpu: 0.0.40
codegen_flags: <defaults>
</compile_context>

<pallas_src>
import functools

import jax
import jax.numpy as jnp
from jax import lax
from jax.experimental import pallas as pl
from jax.experimental.pallas import tpu as pltpu

LN_EPS = 1e-5  # nn.LayerNorm default


def _layernorm_cols(h, gamma, beta):
    # h: (hid, tile_n) f32, normalize over the feature (sublane) axis.
    # gamma/beta: (hid, 1) f32, broadcast over lanes.
    mean = jnp.mean(h, axis=0, keepdims=True)
    centered = h - mean
    var = jnp.mean(centered * centered, axis=0, keepdims=True)
    return centered * lax.rsqrt(var + LN_EPS) * gamma + beta


def _make_mlp_kernel(num_layers):
    n_mid = num_layers - 2

    def kernel(*refs):
        if n_mid > 0:
            x_ref, w_first_ref, w_mid_ref, w_out_ref, vec_ref, bout_ref, o_ref = refs
        else:
            x_ref, w_first_ref, w_out_ref, vec_ref, bout_ref, o_ref = refs
            w_mid_ref = None

        h = x_ref[...].astype(jnp.float32)            # (in, tile_n)
        vec = vec_ref[...].astype(jnp.float32)        # (hid, 3*L-3)

        # First Linear: (hid, in) @ (in, tile_n) -> (hid, tile_n)
        w0 = w_first_ref[...].astype(jnp.float32)
        h = jnp.dot(w0, h, preferred_element_type=jnp.float32) + vec[:, 0:1]

        col = 1
        # Middle blocks: LayerNorm, ReLU, Linear(hid, hid)
        for l in range(n_mid):
            g = vec[:, col:col + 1]
            be = vec[:, col + 1:col + 2]
            b = vec[:, col + 2:col + 3]
            col += 3
            wl = w_mid_ref[l].astype(jnp.float32)     # (hid, hid) static index
            h = _layernorm_cols(h, g, be)
            h = jnp.maximum(h, 0.0)
            h = jnp.dot(wl, h, preferred_element_type=jnp.float32) + b

        # Final LayerNorm, ReLU, Linear(hid, out)
        g = vec[:, col:col + 1]
        be = vec[:, col + 1:col + 2]
        h = _layernorm_cols(h, g, be)
        h = jnp.maximum(h, 0.0)
        wo = w_out_ref[...].astype(jnp.float32)       # (out, hid)
        bo = bout_ref[...].astype(jnp.float32)        # (out, 1)
        h = jnp.dot(wo, h, preferred_element_type=jnp.float32) + bo

        o_ref[...] = h.astype(o_ref.dtype)            # (out, tile_n) lane-dense

    return kernel


# ----------------------------------------------------------------------------
# Parameter construction (PyTorch orientation) + packing for the kernel.
# ----------------------------------------------------------------------------
def init_mlp_params(key, input_dim, hidden_dim, output_dim, num_layers,
                    dtype=jnp.float32):
    """PyTorch-style params.

    Returns (linears, lns):
      linears: list of (W (fan_out, fan_in), b (fan_out,)), length num_layers
      lns:     list of (gamma (hid,), beta (hid,)),         length num_layers-1
    """
    def linear(k, fan_in, fan_out):
        kw, kb = jax.random.split(k)
        bound = 1.0 / (fan_in ** 0.5)
        w = jax.random.uniform(kw, (fan_out, fan_in), dtype, -bound, bound)
        b = jax.random.uniform(kb, (fan_out,), dtype, -bound, bound)
        return w, b

    keys = jax.random.split(key, num_layers)
    linears = [linear(keys[0], input_dim, hidden_dim)]
    lns = []
    for i in range(num_layers - 2):
        lns.append((jnp.ones((hidden_dim,), dtype), jnp.zeros((hidden_dim,), dtype)))
        linears.append(linear(keys[1 + i], hidden_dim, hidden_dim))
    lns.append((jnp.ones((hidden_dim,), dtype), jnp.zeros((hidden_dim,), dtype)))
    linears.append(linear(keys[num_layers - 1], hidden_dim, output_dim))
    return linears, lns


def pack_params(linears, lns):
    """Pack PyTorch-orientation params into the kernel's fused layout."""
    num_layers = len(linears)
    output_dim = linears[-1][0].shape[0]

    w_first = linears[0][0]                       # (hid, in)
    w_out = linears[-1][0]                        # (out, hid)
    b_out = linears[-1][1].reshape(output_dim, 1) # (out, 1)

    cols = [linears[0][1]]                        # b0 (hid,)
    for l in range(num_layers - 2):
        g, be = lns[l]
        cols += [g, be, linears[1 + l][1]]
    g, be = lns[-1]
    cols += [g, be]
    vec = jnp.stack(cols, axis=1)                 # (hid, 3*L-3)

    if num_layers > 2:
        w_mid = jnp.stack([linears[1 + l][0] for l in range(num_layers - 2)],
                          axis=0)                 # (L-2, hid, hid)
    else:
        w_mid = None
    return w_first, w_mid, w_out, vec, b_out


# ----------------------------------------------------------------------------
# Forward pass
# ----------------------------------------------------------------------------
def _round_up(x, m):
    return ((x + m - 1) // m) * m


def _choose_tile(n, tile_n):
    n128 = _round_up(n, 128)
    tile = max(128, (min(tile_n, n128) // 128) * 128)
    # Keep >= 2 grid steps when the batch allows it (v7x megacore).
    if n128 >= 2 * 128 and tile > n128 // 2:
        tile = max(128, (n128 // 2 // 128) * 128)
    return tile


@functools.partial(jax.jit, static_argnames=("num_layers", "tile_n"))
def mlp_forward(x, w_first, w_mid, w_out, vec, b_out, *, num_layers,
                tile_n=1024):
    n, input_dim = x.shape
    output_dim = w_out.shape[0]

    tile = _choose_tile(n, tile_n)
    n_pad = _round_up(n, tile)

    # Batch-on-lanes layout: (input_dim, n_pad), zero-padded tail columns.
    x_pad = jnp.pad(x, ((0, n_pad - n), (0, 0)))
    x_t = x_pad.T

    kernel = _make_mlp_kernel(num_layers)

    in_specs = [pl.BlockSpec((input_dim, tile), lambda i: (0, i))]
    args = [x_t]

    in_specs.append(pl.BlockSpec(w_first.shape, lambda i: (0, 0)))
    args.append(w_first)
    if w_mid is not None:
        in_specs.append(pl.BlockSpec(w_mid.shape, lambda i: (0, 0, 0)))
        args.append(w_mid)
    in_specs.append(pl.BlockSpec(w_out.shape, lambda i: (0, 0)))
    args.append(w_out)
    in_specs.append(pl.BlockSpec(vec.shape, lambda i: (0, 0)))
    args.append(vec)
    in_specs.append(pl.BlockSpec(b_out.shape, lambda i: (0, 0)))
    args.append(b_out)

    out_spec = pl.BlockSpec((output_dim, tile), lambda i: (0, i))

    out_t = pl.pallas_call(
        kernel,
        out_shape=jax.ShapeDtypeStruct((output_dim, n_pad), x.dtype),
        grid_spec=pltpu.PrefetchScalarGridSpec(
            num_scalar_prefetch=0,
            grid=(n_pad // tile,),
            in_specs=in_specs,
            out_specs=out_spec,
        ),
        compiler_params=pltpu.CompilerParams(
            dimension_semantics=("parallel",)),
    )(*args)

    # Back to PyTorch layout (N, output_dim), dropping the padded tail.
    return out_t[:, :n].T


# ----------------------------------------------------------------------------
# Pure-JAX reference (PyTorch semantics) for correctness checking.
# ----------------------------------------------------------------------------
def mlp_reference(x, linears, lns):
    h = x.astype(jnp.float32)
    w, b = linears[0]
    h = h @ w.T + b
    for i in range(len(linears) - 1):
        g, be = lns[i]
        mean = jnp.mean(h, axis=-1, keepdims=True)
        var = jnp.mean((h - mean) ** 2, axis=-1, keepdims=True)
        h = (h - mean) * lax.rsqrt(var + LN_EPS) * g + be
        h = jnp.maximum(h, 0.0)
        w, b = linears[i + 1]
        h = h @ w.T + b
    return h.astype(x.dtype)


if __name__ == "__main__":
    # Point-SDF style MLP: 3-D points in, scalar SDF out.
    INPUT_DIM = 3
    HIDDEN_DIM = 32
    OUTPUT_DIM = 1
    NUM_LAYERS = 4
    N = 1000          # deliberately not a multiple of the tile -> exercises padding

    key = jax.random.PRNGKey(0)
    kx, kp = jax.random.split(key)
    x = jax.random.normal(kx, (N, INPUT_DIM), jnp.float32)

    linears, lns = init_mlp_params(kp, INPUT_DIM, HIDDEN_DIM, OUTPUT_DIM,
                                   NUM_LAYERS)
    w_first, w_mid, w_out, vec, b_out = pack_params(linears, lns)

    out = mlp_forward(x, w_first, w_mid, w_out, vec, b_out,
                      num_layers=NUM_LAYERS, tile_n=1024)
    out = jax.block_until_ready(out)

    ref = mlp_reference(x, linears, lns)
    assert out.shape == (N, OUTPUT_DIM), out.shape
    assert jnp.allclose(out, ref, atol=1e-4, rtol=1e-4), (
        float(jnp.max(jnp.abs(out - ref))))

    print("KERNEL_OK")
</pallas_src>

<mosaic_0001>
module attributes {stable_mosaic.version = 11 : i64} {
  func.func @kernel(%arg0: i32, %arg1: memref<3x512xf32, #tpu.memory_space<vmem>>, %arg2: memref<32x3xf32, #tpu.memory_space<vmem>>, %arg3: memref<2x32x32xf32, #tpu.memory_space<vmem>>, %arg4: memref<1x32xf32, #tpu.memory_space<vmem>>, %arg5: memref<32x9xf32, #tpu.memory_space<vmem>>, %arg6: memref<1x1xf32, #tpu.memory_space<vmem>>, %arg7: memref<1x512xf32, #tpu.memory_space<vmem>>) attributes {dimension_semantics = [#tpu.dimension_semantics<parallel>], iteration_bounds = array<i64: 2>, scalar_prefetch = 0 : i64, scratch_operands = 0 : i64, tpu.core_type = #tpu.core_type<tc>, window_params = [{transform_indices = @transform_0, window_bounds = array<i64: 3, 512>}, {pipeline_mode = #tpu.pipeline_mode<synchronous>, transform_indices = @transform_1, window_bounds = array<i64: 32, 3>}, {pipeline_mode = #tpu.pipeline_mode<synchronous>, transform_indices = @transform_2, window_bounds = array<i64: 2, 32, 32>}, {pipeline_mode = #tpu.pipeline_mode<synchronous>, transform_indices = @transform_3, window_bounds = array<i64: 1, 32>}, {pipeline_mode = #tpu.pipeline_mode<synchronous>, transform_indices = @transform_4, window_bounds = array<i64: 32, 9>}, {pipeline_mode = #tpu.pipeline_mode<synchronous>, transform_indices = @transform_5, window_bounds = array<i64: 1, 1>}, {transform_indices = @transform_6, window_bounds = array<i64: 1, 512>}]} {
    %c0 = arith.constant 0 : index
    %c0_0 = arith.constant 0 : index
    %0 = vector.load %arg1[%c0, %c0_0] : memref<3x512xf32, #tpu.memory_space<vmem>>, vector<3x512xf32>
    %c0_1 = arith.constant 0 : index
    %c0_2 = arith.constant 0 : index
    %1 = vector.load %arg5[%c0_1, %c0_2] : memref<32x9xf32, #tpu.memory_space<vmem>>, vector<32x9xf32>
    %c0_3 = arith.constant 0 : index
    %c0_4 = arith.constant 0 : index
    %2 = vector.load %arg2[%c0_3, %c0_4] : memref<32x3xf32, #tpu.memory_space<vmem>>, vector<32x3xf32>
    %cst = arith.constant dense<0.000000e+00> : vector<32x512xf32>
    %3 = tpu.matmul %2, %0, %cst {dimension_numbers = #tpu.dot_dimension_numbers<[1], [0], [0], [1], [0, 0, 1, 1], [], []>} : vector<32x3xf32>, vector<3x512xf32>, vector<32x512xf32> -> vector<32x512xf32>
    %4 = vector.extract_strided_slice %1 {offsets = [0, 0], sizes = [32, 1], strides = [1, 1]} : vector<32x9xf32> to vector<32x1xf32>
    %5 = vector.broadcast %4 : vector<32x1xf32> to vector<32x512xf32>
    %6 = arith.addf %3, %5 : vector<32x512xf32>
    %7 = vector.extract_strided_slice %1 {offsets = [0, 1], sizes = [32, 1], strides = [1, 1]} : vector<32x9xf32> to vector<32x1xf32>
    %8 = vector.extract_strided_slice %1 {offsets = [0, 2], sizes = [32, 1], strides = [1, 1]} : vector<32x9xf32> to vector<32x1xf32>
    %9 = vector.extract_strided_slice %1 {offsets = [0, 3], sizes = [32, 1], strides = [1, 1]} : vector<32x9xf32> to vector<32x1xf32>
    %c0_5 = arith.constant 0 : index
    %c0_6 = arith.constant 0 : index
    %c0_7 = arith.constant 0 : index
    %10 = vector.load %arg3[%c0_5, %c0_6, %c0_7] : memref<2x32x32xf32, #tpu.memory_space<vmem>>, vector<1x32x32xf32>
    %11 = vector.shape_cast %10 : vector<1x32x32xf32> to vector<32x32xf32>
    %cst_8 = arith.constant dense<0.000000e+00> : vector<512xf32>
    %12 = vector.multi_reduction <add>, %6, %cst_8 [0] : vector<32x512xf32> to vector<512xf32>
    %13 = vector.shape_cast %12 : vector<512xf32> to vector<1x512xf32>
    %cst_9 = arith.constant 3.200000e+01 : f32
    %14 = vector.broadcast %cst_9 : f32 to vector<1x512xf32>
    %15 = arith.divf %13, %14 : vector<1x512xf32>
    %16 = vector.broadcast %15 : vector<1x512xf32> to vector<32x512xf32>
    %17 = arith.subf %6, %16 : vector<32x512xf32>
    %18 = arith.mulf %17, %17 : vector<32x512xf32>
    %cst_10 = arith.constant dense<0.000000e+00> : vector<512xf32>
    %19 = vector.multi_reduction <add>, %18, %cst_10 [0] : vector<32x512xf32> to vector<512xf32>
    %20 = vector.shape_cast %19 : vector<512xf32> to vector<1x512xf32>
    %cst_11 = arith.constant 3.200000e+01 : f32
    %21 = vector.broadcast %cst_11 : f32 to vector<1x512xf32>
    %22 = arith.divf %20, %21 : vector<1x512xf32>
    %cst_12 = arith.constant 9.99999974E-6 : f32
    %23 = vector.broadcast %cst_12 : f32 to vector<1x512xf32>
    %24 = arith.addf %22, %23 : vector<1x512xf32>
    %25 = math.rsqrt %24 : vector<1x512xf32>
    %26 = vector.broadcast %25 : vector<1x512xf32> to vector<32x512xf32>
    %27 = arith.mulf %17, %26 : vector<32x512xf32>
    %28 = vector.broadcast %7 : vector<32x1xf32> to vector<32x512xf32>
    %29 = arith.mulf %27, %28 : vector<32x512xf32>
    %30 = vector.broadcast %8 : vector<32x1xf32> to vector<32x512xf32>
    %31 = arith.addf %29, %30 : vector<32x512xf32>
    %cst_13 = arith.constant 0.000000e+00 : f32
    %32 = vector.broadcast %cst_13 : f32 to vector<32x512xf32>
    %33 = arith.maximumf %31, %32 : vector<32x512xf32>
    %cst_14 = arith.constant dense<0.000000e+00> : vector<32x512xf32>
    %34 = tpu.matmul %11, %33, %cst_14 {dimension_numbers = #tpu.dot_dimension_numbers<[1], [0], [0], [1], [0, 0, 1, 1], [], []>} : vector<32x32xf32>, vector<32x512xf32>, vector<32x512xf32> -> vector<32x512xf32>
    %35 = vector.broadcast %9 : vector<32x1xf32> to vector<32x512xf32>
    %36 = arith.addf %34, %35 : vector<32x512xf32>
    %37 = vector.extract_strided_slice %1 {offsets = [0, 4], sizes = [32, 1], strides = [1, 1]} : vector<32x9xf32> to vector<32x1xf32>
    %38 = vector.extract_strided_slice %1 {offsets = [0, 5], sizes = [32, 1], strides = [1, 1]} : vector<32x9xf32> to vector<32x1xf32>
    %39 = vector.extract_strided_slice %1 {offsets = [0, 6], sizes = [32, 1], strides = [1, 1]} : vector<32x9xf32> to vector<32x1xf32>
    %c1 = arith.constant 1 : index
    %c0_15 = arith.constant 0 : index
    %c0_16 = arith.constant 0 : index
    %40 = vector.load %arg3[%c1, %c0_15, %c0_16] : memref<2x32x32xf32, #tpu.memory_space<vmem>>, vector<1x32x32xf32>
    %41 = vector.shape_cast %40 : vector<1x32x32xf32> to vector<32x32xf32>
    %cst_17 = arith.constant dense<0.000000e+00> : vector<512xf32>
    %42 = vector.multi_reduction <add>, %36, %cst_17 [0] : vector<32x512xf32> to vector<512xf32>
    %43 = vector.shape_cast %42 : vector<512xf32> to vector<1x512xf32>
    %cst_18 = arith.constant 3.200000e+01 : f32
    %44 = vector.broadcast %cst_18 : f32 to vector<1x512xf32>
    %45 = arith.divf %43, %44 : vector<1x512xf32>
    %46 = vector.broadcast %45 : vector<1x512xf32> to vector<32x512xf32>
    %47 = arith.subf %36, %46 : vector<32x512xf32>
    %48 = arith.mulf %47, %47 : vector<32x512xf32>
    %cst_19 = arith.constant dense<0.000000e+00> : vector<512xf32>
    %49 = vector.multi_reduction <add>, %48, %cst_19 [0] : vector<32x512xf32> to vector<512xf32>
    %50 = vector.shape_cast %49 : vector<512xf32> to vector<1x512xf32>
    %cst_20 = arith.constant 3.200000e+01 : f32
    %51 = vector.broadcast %cst_20 : f32 to vector<1x512xf32>
    %52 = arith.divf %50, %51 : vector<1x512xf32>
    %cst_21 = arith.constant 9.99999974E-6 : f32
    %53 = vector.broadcast %cst_21 : f32 to vector<1x512xf32>
    %54 = arith.addf %52, %53 : vector<1x512xf32>
    %55 = math.rsqrt %54 : vector<1x512xf32>
    %56 = vector.broadcast %55 : vector<1x512xf32> to vector<32x512xf32>
    %57 = arith.mulf %47, %56 : vector<32x512xf32>
    %58 = vector.broadcast %37 : vector<32x1xf32> to vector<32x512xf32>
    %59 = arith.mulf %57, %58 : vector<32x512xf32>
    %60 = vector.broadcast %38 : vector<32x1xf32> to vector<32x512xf32>
    %61 = arith.addf %59, %60 : vector<32x512xf32>
    %cst_22 = arith.constant 0.000000e+00 : f32
    %62 = vector.broadcast %cst_22 : f32 to vector<32x512xf32>
    %63 = arith.maximumf %61, %62 : vector<32x512xf32>
    %cst_23 = arith.constant dense<0.000000e+00> : vector<32x512xf32>
    %64 = tpu.matmul %41, %63, %cst_23 {dimension_numbers = #tpu.dot_dimension_numbers<[1], [0], [0], [1], [0, 0, 1, 1], [], []>} : vector<32x32xf32>, vector<32x512xf32>, vector<32x512xf32> -> vector<32x512xf32>
    %65 = vector.broadcast %39 : vector<32x1xf32> to vector<32x512xf32>
    %66 = arith.addf %64, %65 : vector<32x512xf32>
    %67 = vector.extract_strided_slice %1 {offsets = [0, 7], sizes = [32, 1], strides = [1, 1]} : vector<32x9xf32> to vector<32x1xf32>
    %68 = vector.extract_strided_slice %1 {offsets = [0, 8], sizes = [32, 1], strides = [1, 1]} : vector<32x9xf32> to vector<32x1xf32>
    %cst_24 = arith.constant dense<0.000000e+00> : vector<512xf32>
    %69 = vector.multi_reduction <add>, %66, %cst_24 [0] : vector<32x512xf32> to vector<512xf32>
    %70 = vector.shape_cast %69 : vector<512xf32> to vector<1x512xf32>
    %cst_25 = arith.constant 3.200000e+01 : f32
    %71 = vector.broadcast %cst_25 : f32 to vector<1x512xf32>
    %72 = arith.divf %70, %71 : vector<1x512xf32>
    %73 = vector.broadcast %72 : vector<1x512xf32> to vector<32x512xf32>
    %74 = arith.subf %66, %73 : vector<32x512xf32>
    %75 = arith.mulf %74, %74 : vector<32x512xf32>
    %cst_26 = arith.constant dense<0.000000e+00> : vector<512xf32>
    %76 = vector.multi_reduction <add>, %75, %cst_26 [0] : vector<32x512xf32> to vector<512xf32>
    %77 = vector.shape_cast %76 : vector<512xf32> to vector<1x512xf32>
    %cst_27 = arith.constant 3.200000e+01 : f32
    %78 = vector.broadcast %cst_27 : f32 to vector<1x512xf32>
    %79 = arith.divf %77, %78 : vector<1x512xf32>
    %cst_28 = arith.constant 9.99999974E-6 : f32
    %80 = vector.broadcast %cst_28 : f32 to vector<1x512xf32>
    %81 = arith.addf %79, %80 : vector<1x512xf32>
    %82 = math.rsqrt %81 : vector<1x512xf32>
    %83 = vector.broadcast %82 : vector<1x512xf32> to vector<32x512xf32>
    %84 = arith.mulf %74, %83 : vector<32x512xf32>
    %85 = vector.broadcast %67 : vector<32x1xf32> to vector<32x512xf32>
    %86 = arith.mulf %84, %85 : vector<32x512xf32>
    %87 = vector.broadcast %68 : vector<32x1xf32> to vector<32x512xf32>
    %88 = arith.addf %86, %87 : vector<32x512xf32>
    %cst_29 = arith.constant 0.000000e+00 : f32
    %89 = vector.broadcast %cst_29 : f32 to vector<32x512xf32>
    %90 = arith.maximumf %88, %89 : vector<32x512xf32>
    %c0_30 = arith.constant 0 : index
    %c0_31 = arith.constant 0 : index
    %91 = vector.load %arg4[%c0_30, %c0_31] : memref<1x32xf32, #tpu.memory_space<vmem>>, vector<1x32xf32>
    %c0_32 = arith.constant 0 : index
    %c0_33 = arith.constant 0 : index
    %92 = vector.load %arg6[%c0_32, %c0_33] : memref<1x1xf32, #tpu.memory_space<vmem>>, vector<1x1xf32>
    %cst_34 = arith.constant dense<0.000000e+00> : vector<1x512xf32>
    %93 = tpu.matmul %91, %90, %cst_34 {dimension_numbers = #tpu.dot_dimension_numbers<[1], [0], [0], [1], [0, 0, 1, 1], [], []>} : vector<1x32xf32>, vector<32x512xf32>, vector<1x512xf32> -> vector<1x512xf32>
    %94 = vector.broadcast %92 : vector<1x1xf32> to vector<1x512xf32>
    %95 = arith.addf %93, %94 : vector<1x512xf32>
    %c0_35 = arith.constant 0 : index
    %c0_36 = arith.constant 0 : index
    %96 = vector.load %arg7[%c0_35, %c0_36] : memref<1x512xf32, #tpu.memory_space<vmem>>, vector<1x512xf32>
    tpu.vector_store %arg7[%c0_35, %c0_36], %95 {strides = array<i32>} : memref<1x512xf32, #tpu.memory_space<vmem>>, vector<1x512xf32>,
    return
  }
  func.func @transform_0(%arg0: i32) -> (i32, i32) {
    %c0_i32 = arith.constant 0 : i32
    %c0_i32_0 = arith.constant 0 : i32
    return %c0_i32, %arg0 : i32, i32
  }
  func.func @transform_1(%arg0: i32) -> (i32, i32) {
    %c0_i32 = arith.constant 0 : i32
    %c0_i32_0 = arith.constant 0 : i32
    %c0_i32_1 = arith.constant 0 : i32
    return %c0_i32, %c0_i32_0 : i32, i32
  }
  func.func @transform_2(%arg0: i32) -> (i32, i32, i32) {
    %c0_i32 = arith.constant 0 : i32
    %c0_i32_0 = arith.constant 0 : i32
    %c0_i32_1 = arith.constant 0 : i32
    %c0_i32_2 = arith.constant 0 : i32
    return %c0_i32, %c0_i32_0, %c0_i32_1 : i32, i32, i32
  }
  func.func @transform_3(%arg0: i32) -> (i32, i32) {
    %c0_i32 = arith.constant 0 : i32
    %c0_i32_0 = arith.constant 0 : i32
    %c0_i32_1 = arith.constant 0 : i32
    return %c0_i32, %c0_i32_0 : i32, i32
  }
  func.func @transform_4(%arg0: i32) -> (i32, i32) {
    %c0_i32 = arith.constant 0 : i32
    %c0_i32_0 = arith.constant 0 : i32
    %c0_i32_1 = arith.constant 0 : i32
    return %c0_i32, %c0_i32_0 : i32, i32
  }
  func.func @transform_5(%arg0: i32) -> (i32, i32) {
    %c0_i32 = arith.constant 0 : i32
    %c0_i32_0 = arith.constant 0 : i32
    %c0_i32_1 = arith.constant 0 : i32
    return %c0_i32, %c0_i32_0 : i32, i32
  }
  func.func @transform_6(%arg0: i32) -> (i32, i32) {
    %c0_i32 = arith.constant 0 : i32
    %c0_i32_0 = arith.constant 0 : i32
    return %c0_i32, %arg0 : i32, i32
  }
}

</mosaic_0001>

<llo_original>
// kernel: mlp_forward.1
$region0: #{mlp_forward.1}
  #allocation0 [shape = 'u32[]', space=smem, size = 0x4, offset = 0x4, fixed_abs, tag = 'smem constant byte address 0x4 - core index']
  #allocation1 [shape = 'u32[144,128]{1,0:T(1,128)}', space=vmem, size = 0x12000, scoped, tag = 'internal scratch']
  #allocation2 [shape = 'f32[1,1]{1,0:T(1,128)S(1)}', space=vmem, size = 0x200, scoped, tag = 'scoped memory for mlp_forward.1']
  %s0 = inlined_call_operand.vmem [shape: f32[3,1024], index: 0, kind: input, shape index: {}]
  %s1 = inlined_call_operand.vmem [shape: f32[32,3], index: 1, kind: input, shape index: {}]
  %s2 = inlined_call_operand.vmem [shape: f32[2,32,32], index: 2, kind: input, shape index: {}]
  %s3 = inlined_call_operand.vmem [shape: f32[1,32], index: 3, kind: input, shape index: {}]
  %s4 = inlined_call_operand.vmem [shape: f32[32,9], index: 4, kind: input, shape index: {}]
  %s5 = inlined_call_operand.<no memory space> [shape: f32[1,1], index: 5, kind: input, shape index: {}]
  %s6 = inlined_call_operand.vmem [shape: f32[1,1024], index: 6, kind: output, shape index: {}]
  %s7 = sld [smem:[#allocation0]]
  $region57: #{mlp_forward.1} parent=0
    _
  %s9 = ssub.s32 1, %s7
  %s10 = scalar_select 0, %s9, %s7
  %v11 = vstv %s5
  %12 = vst [vmem:[#allocation2] sm:$0x1] %v11
  loop: start=0, step=1, limit=4
  $region2: #{mlp_forward.1} parent=0 // loop_pre_header
    _
  $region3: #{mlp_forward.1} parent=0 // loop_header
    %s14 = sphi 0, %s18
    %p15 = scmp.ge.s32.totalorder %s14, 4
    %s24 = sphi 0, %s26
    %s27 = sphi 0, %s24
    %s28 = sphi 0, %s27
    %s44 = sphi 0, %s28
    %s48 = sphi 0, %s48
    %s50 = sphi 0, %s48
    %s51 = sphi 0, %s50
    %s65 = sphi 0, %s51
    %s69 = sphi 0, %s69
    %s71 = sphi 0, %s69
    %s72 = sphi 0, %s71
    %s86 = sphi 0, %s72
    %s90 = sphi 0, %s90
    %s92 = sphi 0, %s90
    %s93 = sphi 0, %s92
    %s107 = sphi 0, %s93
    %s111 = sphi 0, %s111
    %s113 = sphi 0, %s111
    %s114 = sphi 0, %s113
    %s128 = sphi 0, %s114
    %s132 = sphi 0, %s132
    %s134 = sphi 0, %s132
    %s135 = sphi 0, %s134
    %s149 = sphi 0, %s135
    %s155 = sphi 0, %s157
    %s158 = sphi 0, %s155
    %s159 = sphi 0, %s158
    %s175 = sphi 0, %s159
  $region4: #{mlp_forward.1} parent=0 // loop_header_branch
    %17 = sbr.rel (%p15) target = $region8
  $region5: #{mlp_forward.1} parent=0 // loop_body
    %s19 = ssub.s32 %s14, 1
    %s20 = ssub.s32 %s14, 2
    %s21 = sadd.s32 %s14, 1
    %s22 = ssub.s32 %s14, %s21
    %p23 = scmp.eq.s32.totalorder %s22, 0
    %s25 = sadd.s32 %s24, 1
    %s26 = scalar_select %p23, %s24, %s25
    %p29 = pneg %p23
    %p30 = scmp.eq.s32.totalorder %s14, 1
    %p31 = por %p29, %p30
    %p32 = scmp.ne.s32.totalorder %s24, %s27
    %p33 = scmp.eq.s32.totalorder %s14, 0
    %p34 = por %p32, %p33
    %p35 = scmp.ne.s32.totalorder %s24, %s27
    %p36 = scmp.eq.s32.totalorder %s19, 1
    %p37 = por %p35, %p36
    %p38 = scmp.ne.s32.totalorder %s27, %s28
    %p39 = scmp.eq.s32.totalorder %s19, 0
    %p40 = por %p38, %p39
    %p41 = scmp.ne.s32.totalorder %s27, %s28
    %p42 = scmp.eq.s32.totalorder %s20, 1
    %p43 = por %p41, %p42
    %p45 = scmp.ne.s32.totalorder %s28, %s44
    %p46 = scmp.eq.s32.totalorder %s20, 0
    %p47 = por %p45, %p46
    %s49 = sadd.s32 %s48, 1
    %p52 = scmp.eq.s32.totalorder %s14, 1
    %p53 = scmp.ne.s32.totalorder %s48, %s50
    %p54 = scmp.eq.s32.totalorder %s14, 0
    %p55 = por %p53, %p54
    %p56 = scmp.ne.s32.totalorder %s48, %s50
    %p57 = scmp.eq.s32.totalorder %s19, 1
    %p58 = por %p56, %p57
    %p59 = scmp.ne.s32.totalorder %s50, %s51
    %p60 = scmp.eq.s32.totalorder %s19, 0
    %p61 = por %p59, %p60
    %p62 = scmp.ne.s32.totalorder %s50, %s51
    %p63 = scmp.eq.s32.totalorder %s20, 1
    %p64 = por %p62, %p63
    %p66 = scmp.ne.s32.totalorder %s51, %s65
    %p67 = scmp.eq.s32.totalorder %s20, 0
    %p68 = por %p66, %p67
    %s70 = sadd.s32 %s69, 1
    %p73 = scmp.eq.s32.totalorder %s14, 1
    %p74 = scmp.ne.s32.totalorder %s69, %s71
    %p75 = scmp.eq.s32.totalorder %s14, 0
    %p76 = por %p74, %p75
    %p77 = scmp.ne.s32.totalorder %s69, %s71
    %p78 = scmp.eq.s32.totalorder %s19, 1
    %p79 = por %p77, %p78
    %p80 = scmp.ne.s32.totalorder %s71, %s72
    %p81 = scmp.eq.s32.totalorder %s19, 0
    %p82 = por %p80, %p81
    %p83 = scmp.ne.s32.totalorder %s71, %s72
    %p84 = scmp.eq.s32.totalorder %s20, 1
    %p85 = por %p83, %p84
    %p87 = scmp.ne.s32.totalorder %s72, %s86
    %p88 = scmp.eq.s32.totalorder %s20, 0
    %p89 = por %p87, %p88
    %s91 = sadd.s32 %s90, 1
    %p94 = scmp.eq.s32.totalorder %s14, 1
    %p95 = scmp.ne.s32.totalorder %s90, %s92
    %p96 = scmp.eq.s32.totalorder %s14, 0
    %p97 = por %p95, %p96
    %p98 = scmp.ne.s32.totalorder %s90, %s92
    %p99 = scmp.eq.s32.totalorder %s19, 1
    %p100 = por %p98, %p99
    %p101 = scmp.ne.s32.totalorder %s92, %s93
    %p102 = scmp.eq.s32.totalorder %s19, 0
    %p103 = por %p101, %p102
    %p104 = scmp.ne.s32.totalorder %s92, %s93
    %p105 = scmp.eq.s32.totalorder %s20, 1
    %p106 = por %p104, %p105
    %p108 = scmp.ne.s32.totalorder %s93, %s107
    %p109 = scmp.eq.s32.totalorder %s20, 0
    %p110 = por %p108, %p109
    %s112 = sadd.s32 %s111, 1
    %p115 = scmp.eq.s32.totalorder %s14, 1
    %p116 = scmp.ne.s32.totalorder %s111, %s113
    %p117 = scmp.eq.s32.totalorder %s14, 0
    %p118 = por %p116, %p117
    %p119 = scmp.ne.s32.totalorder %s111, %s113
    %p120 = scmp.eq.s32.totalorder %s19, 1
    %p121 = por %p119, %p120
    %p122 = scmp.ne.s32.totalorder %s113, %s114
    %p123 = scmp.eq.s32.totalorder %s19, 0
    %p124 = por %p122, %p123
    %p125 = scmp.ne.s32.totalorder %s113, %s114
    %p126 = scmp.eq.s32.totalorder %s20, 1
    %p127 = por %p125, %p126
    %p129 = scmp.ne.s32.totalorder %s114, %s128
    %p130 = scmp.eq.s32.totalorder %s20, 0
    %p131 = por %p129, %p130
    %s133 = sadd.s32 %s132, 1
    %p136 = scmp.eq.s32.totalorder %s14, 1
    %p137 = scmp.ne.s32.totalorder %s132, %s134
    %p138 = scmp.eq.s32.totalorder %s14, 0
    %p139 = por %p137, %p138
    %p140 = scmp.ne.s32.totalorder %s132, %s134
    %p141 = scmp.eq.s32.totalorder %s19, 1
    %p142 = por %p140, %p141
    %p143 = scmp.ne.s32.totalorder %s134, %s135
    %p144 = scmp.eq.s32.totalorder %s19, 0
    %p145 = por %p143, %p144
    %p146 = scmp.ne.s32.totalorder %s134, %s135
    %p147 = scmp.eq.s32.totalorder %s20, 1
    %p148 = por %p146, %p147
    %p150 = scmp.ne.s32.totalorder %s135, %s149
    %p151 = scmp.eq.s32.totalorder %s20, 0
    %p152 = por %p150, %p151
    %s153 = ssub.s32 %s14, %s21
    %p154 = scmp.eq.s32.totalorder %s153, 0
    %s156 = sadd.s32 %s155, 1
    %s157 = scalar_select %p154, %s155, %s156
    %p160 = pneg %p154
    %p161 = scmp.eq.s32.totalorder %s14, 1
    %p162 = por %p160, %p161
    %p163 = scmp.ne.s32.totalorder %s155, %s158
    %p164 = scmp.eq.s32.totalorder %s14, 0
    %p165 = por %p163, %p164
    %p166 = scmp.ne.s32.totalorder %s155, %s158
    %p167 = scmp.eq.s32.totalorder %s19, 1
    %p168 = por %p166, %p167
    %p169 = scmp.ne.s32.totalorder %s158, %s159
    %p170 = scmp.eq.s32.totalorder %s19, 0
    %p171 = por %p169, %p170
    %p172 = scmp.ne.s32.totalorder %s158, %s159
    %p173 = scmp.eq.s32.totalorder %s20, 1
    %p174 = por %p172, %p173
    %p176 = scmp.ne.s32.totalorder %s159, %s175
    %p177 = scmp.eq.s32.totalorder %s20, 0
    %p178 = por %p176, %p177
    %p179 = scmp.le.s32.totalorder 1, %s14
    %p180 = scmp.lt.s32.totalorder %s14, 3
    %p181 = pnand %p179, %p180
    %p182 = pneg %p181
    // Predicated region
    $region9: #{mlp_forward.1} parent=5 // pred_check
      _
    $region10: #{mlp_forward.1} parent=5 // pred_check_branch
      %184 = sbr.rel (%p181) target = $region12
    $region11: #{mlp_forward.1} parent=5 // pred_region
      %s185 = ssub.s32 %s14, 1
      // Predicated region
      $region13: #{mlp_forward.1} parent=11 // pred_check
        %p186 = pneg %p61
      $region14: #{mlp_forward.1} parent=11 // pred_check_branch
        %188 = sbr.rel (%p186) target = $region16
      $region15: #{mlp_forward.1} parent=11 // pred_region
        _
      $region16: #{mlp_forward.1} parent=11 // pred_fallthru
        _
      // Predicated region
      $region17: #{mlp_forward.1} parent=11 // pred_check
        %p189 = pneg %p82
      $region18: #{mlp_forward.1} parent=11 // pred_check_branch
        %191 = sbr.rel (%p189) target = $region20
      $region19: #{mlp_forward.1} parent=11 // pred_region
        _
      $region20: #{mlp_forward.1} parent=11 // pred_fallthru
        _
      // Predicated region
      $region21: #{mlp_forward.1} parent=11 // pred_check
        %p192 = pneg %p103
      $region22: #{mlp_forward.1} parent=11 // pred_check_branch
        %194 = sbr.rel (%p192) target = $region24
      $region23: #{mlp_forward.1} parent=11 // pred_region
        _
      $region24: #{mlp_forward.1} parent=11 // pred_fallthru
        _
      // Predicated region
      $region25: #{mlp_forward.1} parent=11 // pred_check
        %p195 = pneg %p124
      $region26: #{mlp_forward.1} parent=11 // pred_check_branch
        %197 = sbr.rel (%p195) target = $region28
      $region27: #{mlp_forward.1} parent=11 // pred_region
        _
      $region28: #{mlp_forward.1} parent=11 // pred_fallthru
        _
      // Predicated region
      $region29: #{mlp_forward.1} parent=11 // pred_check
        %p198 = pneg %p145
      $region30: #{mlp_forward.1} parent=11 // pred_check_branch
        %200 = sbr.rel (%p198) target = $region32
      $region31: #{mlp_forward.1} parent=11 // pred_region
        _
      $region32: #{mlp_forward.1} parent=11 // pred_fallthru
        _
    $region12: #{mlp_forward.1} parent=5 // pred_fallthru
      _
    %p201 = scmp.lt.s32.totalorder %s14, 2
    // Predicated region
    $region33: #{mlp_forward.1} parent=5 // pred_check
      %p202 = pneg %p201
    $region34: #{mlp_forward.1} parent=5 // pred_check_branch
      %204 = sbr.rel (%p202) target = $region36
    $region35: #{mlp_forward.1} parent=5 // pred_region
      // Predicated region
      $region37: #{mlp_forward.1} parent=35 // pred_check
        %p205 = pneg %p34
      $region38: #{mlp_forward.1} parent=35 // pred_check_branch
        %207 = sbr.rel (%p205) target = $region40
      $region39: #{mlp_forward.1} parent=35 // pred_region
        %s208 = smul.u32 4, %s14
        %p209 = scmp.lt.s32.totalorder %s208, 7
        %s210 = scalar_select %p209, %s208, 7
        %s211 = smul.addr %s210, 4
        %s212 = scalar_lea.vmem %s0, %s211
        %s213 = smul.u32 4, %s14
      $region40: #{mlp_forward.1} parent=35 // pred_fallthru
        _
    $region36: #{mlp_forward.1} parent=5 // pred_fallthru
      _
    %p214 = scmp.le.s32.totalorder 1, %s14
    %p215 = scmp.lt.s32.totalorder %s14, 3
    %p216 = pnand %p214, %p215
    %p217 = pneg %p216
    // Predicated region
    $region41: #{mlp_forward.1} parent=5 // pred_check
      _
    $region42: #{mlp_forward.1} parent=5 // pred_check_branch
      %219 = sbr.rel (%p216) target = $region44
    $region43: #{mlp_forward.1} parent=5 // pred_region
      %s220 = ssub.s32 %s14, 1
      %s221 = smul.u32 4, %s19
      %p222 = scmp.lt.s32.totalorder %s221, 7
      %s223 = scalar_select %p222, %s221, 7
      %s224 = smul.addr %s223, 4
      %s225 = scalar_lea.vmem %s0, %s224
      %p226 = pneg %p40
      %p227 = pneg %p37
      %p228 = pneg %p61
      %p229 = pneg %p58
      %p230 = pneg %p82
      %p231 = pneg %p79
      %p232 = pneg %p103
      %p233 = pneg %p100
      %p234 = pneg %p124
      %p235 = pneg %p121
      %p236 = pneg %p145
      %p237 = pneg %p142
      %p238 = pneg %p171
      %p239 = pneg %p168
      %s240 = smul.u32 4, %s19
      %p241 = scmp.lt.s32.totalorder %s240, 7
      %s242 = scalar_select %p241, %s240, 7
      %s243 = scalar_lea.vmem %s6, %s242
      %s244 = smul.u32 4, %s19
      %p245 = scmp.lt.s32.totalorder %s244, 7
      %s246 = scalar_select %p245, %s244, 7
      %s247 = smul.addr %s246, 4
      %s248 = scalar_lea.vmem %s0, %s247
      %s249 = smul.u32 4, %s19
      %s250 = smul.u32 4, %s19
      %p251 = scmp.lt.s32.totalorder %s250, 7
      %s252 = scalar_select %p251, %s250, 7
      %s253 = scalar_lea.vmem %s6, %s252
      %s254 = smul.u32 4, %s19
      %v255 = vld [vmem:[%s248] sm:$0x77]
      %v256 = vld [vmem:[%s248 + $0x8] sm:$0x77]
      %v257 = vld [vmem:[%s4] sm:$0xff]
      %v258 = vld [vmem:[%s4 + $0x8] sm:$0xff]
      %v259 = vld [vmem:[%s4 + $0x10] sm:$0xff]
      %v260 = vld [vmem:[%s4 + $0x18] sm:$0xff]
      %v261 = vld [vmem:[%s1] sm:$0xff]
      %v262 = vld [vmem:[%s1 + $0x8] sm:$0xff]
      %v263 = vld [vmem:[%s1 + $0x10] sm:$0xff]
      %v264 = vld [vmem:[%s1 + $0x18] sm:$0xff]
      %266 = vset.pattern.permute.xlu0 0
      %267 = vperm.xlu0 %266, %v257
      %v268 = vpop.permute.xlu0 %267
      %271 = vset.pattern.permute.xlu0 0
      %272 = vperm.xlu0 %271, %v258
      %v273 = vpop.permute.xlu0 %272
      %276 = vset.pattern.permute.xlu0 0
      %277 = vperm.xlu0 %276, %v259
      %v278 = vpop.permute.xlu0 %277
      %281 = vset.pattern.permute.xlu0 0
      %282 = vperm.xlu0 %281, %v260
      %v283 = vpop.permute.xlu0 %282
      %v287 = vcombine.high %v255, %v255
      %v288 = vcombine.high %v256, %v256
      %vm289 = vcmask 23552
      %v291 = vsel %vm289, %v261, 0
      %v294 = vsel %vm289, %v262, 0
      %v297 = vsel %vm289, %v263, 0
      %v300 = vsel %vm289, %v264, 0
      %vm302 = vcmask 1042432
      %v303 = vsel %vm302, %v255, 0
      %v305 = vsel %vm302, %v287, 0
      %v307 = vsel %vm302, %v256, 0
      %v309 = vsel %vm302, %v288, 0
      %311 = vmatprep.subr.mxu0 %v305
      %312 = vmatpush1.msra.mxu0 %v303
      %313 = vmatprep.subr.mxu0 0.0
      %314 = vmatpush1.msra.mxu0 0.0
      %315 = vmatprep.subr.mxu0 0.0
      %316 = vmatpush1.msra.mxu0 0.0
      %317 = vmatprep.subr.mxu0 0.0
      %318 = vmatpush1.msra.mxu0 0.0
      %319 = vmatprep.subr.mxu0 0.0
      %320 = vmatpush1.msra.mxu0 0.0
      %321 = vmatprep.subr.mxu0 0.0
      %322 = vmatpush1.msra.mxu0 0.0
      %323 = vmatprep.subr.mxu0 0.0
      %324 = vmatpush1.msra.mxu0 0.0
      %325 = vmatprep.subr.mxu0 0.0
      %326 = vmatpush1.msra.mxu0 0.0
      %327 = vmatprep.subr.mxu0 0.0
      %328 = vmatpush1.msra.mxu0 0.0
      %329 = vmatprep.subr.mxu0 0.0
      %330 = vmatpush1.msra.mxu0 0.0
      %331 = vmatprep.subr.mxu0 0.0
      %332 = vmatpush1.msra.mxu0 0.0
      %333 = vmatprep.subr.mxu0 0.0
      %334 = vmatpush1.msra.mxu0 0.0
      %335 = vmatprep.subr.mxu0 0.0
      %336 = vmatpush1.msra.mxu0 0.0
      %337 = vmatprep.subr.mxu0 0.0
      %338 = vmatpush1.msra.mxu0 0.0
      %339 = vmatprep.subr.mxu0 0.0
      %340 = vmatpush1.msra.mxu0 0.0
      %341 = vmatprep.subr.mxu0 0.0
      %342 = vmatpush1.msra.mxu0 0.0
      %343 = vmatprep.subr.mxu0 0.0
      %344 = vmatpush1.msra.mxu0 0.0
      %345 = vmatprep.subr.mxu0 0.0
      %346 = vmatpush1.msra.mxu0 0.0
      %347 = vmatprep.subr.mxu0 0.0
      %348 = vmatpush1.msra.mxu0 0.0
      %349 = vmatprep.subr.mxu0 0.0
      %350 = vmatpush1.msra.mxu0 0.0
      %351 = vmatprep.subr.mxu0 0.0
      %352 = vmatpush1.msra.mxu0 0.0
      %353 = vmatprep.subr.mxu0 0.0
      %354 = vmatpush1.msra.mxu0 0.0
      %355 = vmatprep.subr.mxu0 0.0
      %356 = vmatpush1.msra.mxu0 0.0
      %357 = vmatprep.subr.mxu0 0.0
      %358 = vmatpush1.msra.mxu0 0.0
      %359 = vmatprep.subr.mxu0 0.0
      %360 = vmatpush1.msra.mxu0 0.0
      %361 = vmatprep.subr.mxu0 0.0
      %362 = vmatpush1.msra.mxu0 0.0
      %363 = vmatprep.subr.mxu0 0.0
      %364 = vmatpush1.msra.mxu0 0.0
      %365 = vmatprep.subr.mxu0 0.0
      %366 = vmatpush1.msra.mxu0 0.0
      %367 = vmatprep.subr.mxu0 0.0
      %368 = vmatpush1.msra.mxu0 0.0
      %369 = vmatprep.subr.mxu0 0.0
      %370 = vmatpush1.msra.mxu0 0.0
      %371 = vmatprep.subr.mxu0 0.0
      %372 = vmatpush1.msra.mxu0 0.0
      %373 = vmatprep.subr.mxu0 0.0
      %374 = vmatpush1.msra.mxu0 0.0
      %375 = vmatprep.mubr.f32.mxu0 0.0
      %376 = vmatmul.mubr.f32.gmra.mrb[0].mxu0 %v291
      %v377 = vpop.f32.mrb[0].mxu0
      %v378 = vadd.f32 %v268, %v377
      %v379 = vpop.f32.mrb[0].mxu0
      %v380 = vadd.f32 %v268, %v379
      %381 = vmatprep.mubr.f32.mxu0 0.0
      %382 = vmatmul.mubr.f32.gmra.mrb[0].mxu0 %v294
      %v383 = vpop.f32.mrb[0].mxu0
      %v384 = vadd.f32 %v273, %v383
      %v385 = vpop.f32.mrb[0].mxu0
      %v386 = vadd.f32 %v273, %v385
      %387 = vmatprep.mubr.f32.mxu0 0.0
      %388 = vmatmul.mubr.f32.gmra.mrb[0].mxu0 %v297
      %v389 = vpop.f32.mrb[0].mxu0
      %v390 = vadd.f32 %v278, %v389
      %v391 = vpop.f32.mrb[0].mxu0
      %v392 = vadd.f32 %v278, %v391
      %393 = vmatprep.mubr.f32.mxu0 0.0
      %394 = vmatmul.mubr.f32.gmra.mrb[0].mxu0 %v300
      %v395 = vpop.f32.mrb[0].mxu0
      %v396 = vadd.f32 %v283, %v395
      %v397 = vpop.f32.mrb[0].mxu0
      %v398 = vadd.f32 %v283, %v397
      %399 = vdwg.mxu0
      %400 = vmatprep.subr.mxu0 %v309
      %401 = vmatpush1.msra.mxu0 %v307
      %402 = vmatprep.subr.mxu0 0.0
      %403 = vmatpush1.msra.mxu0 0.0
      %404 = vmatprep.subr.mxu0 0.0
      %405 = vmatpush1.msra.mxu0 0.0
      %406 = vmatprep.subr.mxu0 0.0
      %407 = vmatpush1.msra.mxu0 0.0
      %408 = vmatprep.subr.mxu0 0.0
      %409 = vmatpush1.msra.mxu0 0.0
      %410 = vmatprep.subr.mxu0 0.0
      %411 = vmatpush1.msra.mxu0 0.0
      %412 = vmatprep.subr.mxu0 0.0
      %413 = vmatpush1.msra.mxu0 0.0
      %414 = vmatprep.subr.mxu0 0.0
      %415 = vmatpush1.msra.mxu0 0.0
      %416 = vmatprep.subr.mxu0 0.0
      %417 = vmatpush1.msra.mxu0 0.0
      %418 = vmatprep.subr.mxu0 0.0
      %419 = vmatpush1.msra.mxu0 0.0
      %420 = vmatprep.subr.mxu0 0.0
      %421 = vmatpush1.msra.mxu0 0.0
      %422 = vmatprep.subr.mxu0 0.0
      %423 = vmatpush1.msra.mxu0 0.0
      %424 = vmatprep.subr.mxu0 0.0
      %425 = vmatpush1.msra.mxu0 0.0
      %426 = vmatprep.subr.mxu0 0.0
      %427 = vmatpush1.msra.mxu0 0.0
      %428 = vmatprep.subr.mxu0 0.0
      %429 = vmatpush1.msra.mxu0 0.0
      %430 = vmatprep.subr.mxu0 0.0
      %431 = vmatpush1.msra.mxu0 0.0
      %432 = vmatprep.subr.mxu0 0.0
      %433 = vmatpush1.msra.mxu0 0.0
      %434 = vmatprep.subr.mxu0 0.0
      %435 = vmatpush1.msra.mxu0 0.0
      %436 = vmatprep.subr.mxu0 0.0
      %437 = vmatpush1.msra.mxu0 0.0
      %438 = vmatprep.subr.mxu0 0.0
      %439 = vmatpush1.msra.mxu0 0.0
      %440 = vmatprep.subr.mxu0 0.0
      %441 = vmatpush1.msra.mxu0 0.0
      %442 = vmatprep.subr.mxu0 0.0
      %443 = vmatpush1.msra.mxu0 0.0
      %444 = vmatprep.subr.mxu0 0.0
      %445 = vmatpush1.msra.mxu0 0.0
      %446 = vmatprep.subr.mxu0 0.0
      %447 = vmatpush1.msra.mxu0 0.0
      %448 = vmatprep.subr.mxu0 0.0
      %449 = vmatpush1.msra.mxu0 0.0
      %450 = vmatprep.subr.mxu0 0.0
      %451 = vmatpush1.msra.mxu0 0.0
      %452 = vmatprep.subr.mxu0 0.0
      %453 = vmatpush1.msra.mxu0 0.0
      %454 = vmatprep.subr.mxu0 0.0
      %455 = vmatpush1.msra.mxu0 0.0
      %456 = vmatprep.subr.mxu0 0.0
      %457 = vmatpush1.msra.mxu0 0.0
      %458 = vmatprep.subr.mxu0 0.0
      %459 = vmatpush1.msra.mxu0 0.0
      %460 = vmatprep.subr.mxu0 0.0
      %461 = vmatpush1.msra.mxu0 0.0
      %462 = vmatprep.subr.mxu0 0.0
      %463 = vmatpush1.msra.mxu0 0.0
      %464 = vmatprep.mubr.f32.mxu0 0.0
      %465 = vmatmul.mubr.f32.gmra.mrb[0].mxu0 %v291
      %v466 = vpop.f32.mrb[0].mxu0
      %v467 = vadd.f32 %v268, %v466
      %v468 = vpop.f32.mrb[0].mxu0
      %v469 = vadd.f32 %v268, %v468
      %470 = vmatprep.mubr.f32.mxu0 0.0
      %471 = vmatmul.mubr.f32.gmra.mrb[0].mxu0 %v294
      %v472 = vpop.f32.mrb[0].mxu0
      %v473 = vadd.f32 %v273, %v472
      %v474 = vpop.f32.mrb[0].mxu0
      %v475 = vadd.f32 %v273, %v474
      %476 = vmatprep.mubr.f32.mxu0 0.0
      %477 = vmatmul.mubr.f32.gmra.mrb[0].mxu0 %v297
      %v478 = vpop.f32.mrb[0].mxu0
      %v479 = vadd.f32 %v278, %v478
      %v480 = vpop.f32.mrb[0].mxu0
      %v481 = vadd.f32 %v278, %v480
      %482 = vmatprep.mubr.f32.mxu0 0.0
      %483 = vmatmul.mubr.f32.gmra.mrb[0].mxu0 %v300
      %v484 = vpop.f32.mrb[0].mxu0
      %v485 = vadd.f32 %v283, %v484
      %v486 = vpop.f32.mrb[0].mxu0
      %v487 = vadd.f32 %v283, %v486
      %488 = vdwg.mxu0
      %v489 = vld [vmem:[%s2] sm:$0xff]
      %v490 = vld [vmem:[%s2 + $0x8] sm:$0xff]
      %v491 = vld [vmem:[%s2 + $0x10] sm:$0xff]
      %v492 = vld [vmem:[%s2 + $0x18] sm:$0xff]
      %v493 = vadd.f32 %v378, %v384
      %v494 = vadd.f32 %v493, %v390
      %v495 = vadd.f32 %v494, %v396
      %v496 = vrot.slane %v495, 4
      %v497 = vadd.f32 %v495, %v496
      %v498 = vrot.slane %v497, 2
      %v499 = vadd.f32 %v497, %v498
      %v500 = vrot.slane %v499, 1
      %v501 = vadd.f32 %v499, %v500
      %v502 = vadd.f32 %v380, %v386
      %v503 = vadd.f32 %v502, %v392
      %v504 = vadd.f32 %v503, %v398
      %v505 = vrot.slane %v504, 4
      %v506 = vadd.f32 %v504, %v505
      %v507 = vrot.slane %v506, 2
      %v508 = vadd.f32 %v506, %v507
      %v509 = vrot.slane %v508, 1
      %v510 = vadd.f32 %v508, %v509
      %v511 = vadd.f32 %v467, %v473
      %v512 = vadd.f32 %v511, %v479
      %v513 = vadd.f32 %v512, %v485
      %v514 = vrot.slane %v513, 4
      %v515 = vadd.f32 %v513, %v514
      %v516 = vrot.slane %v515, 2
      %v517 = vadd.f32 %v515, %v516
      %v518 = vrot.slane %v517, 1
      %v519 = vadd.f32 %v517, %v518
      %v520 = vadd.f32 %v469, %v475
      %v521 = vadd.f32 %v520, %v481
      %v522 = vadd.f32 %v521, %v487
      %v523 = vrot.slane %v522, 4
      %v524 = vadd.f32 %v522, %v523
      %v525 = vrot.slane %v524, 2
      %v526 = vadd.f32 %v524, %v525
      %v527 = vrot.slane %v526, 1
      %v528 = vadd.f32 %v526, %v527
      %v529 = vrcp.pop 32.0
      %v530 = vmul.f32 %v501, %v529
      %v531 = vmul.f32 %v510, %v529
      %v532 = vmul.f32 %v519, %v529
      %v533 = vmul.f32 %v528, %v529
      %v534 = vsub.f32 %v378, %v530
      %v535 = vsub.f32 %v380, %v531
      %v536 = vsub.f32 %v467, %v532
      %v537 = vsub.f32 %v469, %v533
      %v538 = vsub.f32 %v384, %v530
      %v539 = vsub.f32 %v386, %v531
      %v540 = vsub.f32 %v473, %v532
      %v541 = vsub.f32 %v475, %v533
      %v542 = vsub.f32 %v390, %v530
      %v543 = vsub.f32 %v392, %v531
      %v544 = vsub.f32 %v479, %v532
      %v545 = vsub.f32 %v481, %v533
      %v546 = vsub.f32 %v396, %v530
      %v547 = vsub.f32 %v398, %v531
      %v548 = vsub.f32 %v485, %v532
      %v549 = vsub.f32 %v487, %v533
      %v550 = vmul.f32 %v534, %v534
      %v551 = vmul.f32 %v535, %v535
      %v552 = vmul.f32 %v536, %v536
      %v553 = vmul.f32 %v537, %v537
      %v554 = vmul.f32 %v538, %v538
      %v555 = vmul.f32 %v539, %v539
      %v556 = vmul.f32 %v540, %v540
      %v557 = vmul.f32 %v541, %v541
      %v558 = vmul.f32 %v542, %v542
      %v559 = vmul.f32 %v543, %v543
      %v560 = vmul.f32 %v544, %v544
      %v561 = vmul.f32 %v545, %v545
      %v562 = vmul.f32 %v546, %v546
      %v563 = vmul.f32 %v547, %v547
      %v564 = vmul.f32 %v548, %v548
      %v565 = vmul.f32 %v549, %v549
      %v566 = vadd.f32 %v550, %v554
      %v567 = vadd.f32 %v566, %v558
      %v568 = vadd.f32 %v567, %v562
      %v569 = vrot.slane %v568, 4
      %v570 = vadd.f32 %v568, %v569
      %v571 = vrot.slane %v570, 2
      %v572 = vadd.f32 %v570, %v571
      %v573 = vrot.slane %v572, 1
      %v574 = vadd.f32 %v572, %v573
      %v575 = vadd.f32 %v551, %v555
      %v576 = vadd.f32 %v575, %v559
      %v577 = vadd.f32 %v576, %v563
      %v578 = vrot.slane %v577, 4
      %v579 = vadd.f32 %v577, %v578
      %v580 = vrot.slane %v579, 2
      %v581 = vadd.f32 %v579, %v580
      %v582 = vrot.slane %v581, 1
      %v583 = vadd.f32 %v581, %v582
      %v584 = vadd.f32 %v552, %v556
      %v585 = vadd.f32 %v584, %v560
      %v586 = vadd.f32 %v585, %v564
      %v587 = vrot.slane %v586, 4
      %v588 = vadd.f32 %v586, %v587
      %v589 = vrot.slane %v588, 2
      %v590 = vadd.f32 %v588, %v589
      %v591 = vrot.slane %v590, 1
      %v592 = vadd.f32 %v590, %v591
      %v593 = vadd.f32 %v553, %v557
      %v594 = vadd.f32 %v593, %v561
      %v595 = vadd.f32 %v594, %v565
      %v596 = vrot.slane %v595, 4
      %v597 = vadd.f32 %v595, %v596
      %v598 = vrot.slane %v597, 2
      %v599 = vadd.f32 %v597, %v598
      %v600 = vrot.slane %v599, 1
      %v601 = vadd.f32 %v599, %v600
      %v602 = vmul.f32 %v574, %v529
      %v603 = vmul.f32 %v583, %v529
      %v604 = vmul.f32 %v592, %v529
      %v605 = vmul.f32 %v601, %v529
      %v606 = vadd.f32 %v602, 1e-05
      %v607 = vadd.f32 %v603, 1e-05
      %v608 = vadd.f32 %v604, 1e-05
      %v609 = vadd.f32 %v605, 1e-05
      %v610 = vrsqrt.pop %v606
      %v611 = vrsqrt.pop %v607
      %v612 = vrsqrt.pop %v608
      %v613 = vrsqrt.pop %v609
      %v614 = vmul.f32 %v534, %v610
      %v615 = vmul.f32 %v535, %v611
      %v616 = vmul.f32 %v536, %v612
      %v617 = vmul.f32 %v537, %v613
      %v618 = vmul.f32 %v538, %v610
      %v619 = vmul.f32 %v539, %v611
      %v620 = vmul.f32 %v540, %v612
      %v621 = vmul.f32 %v541, %v613
      %v622 = vmul.f32 %v542, %v610
      %v623 = vmul.f32 %v543, %v611
      %v624 = vmul.f32 %v544, %v612
      %v625 = vmul.f32 %v545, %v613
      %v626 = vmul.f32 %v546, %v610
      %v627 = vmul.f32 %v547, %v611
      %v628 = vmul.f32 %v548, %v612
      %v629 = vmul.f32 %v549, %v613
      %630 = vset.pattern.permute.xlu0 1
      %631 = vperm.xlu0 %630, %v257
      %v632 = vpop.permute.xlu0 %631
      %634 = vset.pattern.permute.xlu0 1
      %635 = vperm.xlu0 %634, %v258
      %v636 = vpop.permute.xlu0 %635
      %638 = vset.pattern.permute.xlu0 1
      %639 = vperm.xlu0 %638, %v259
      %v640 = vpop.permute.xlu0 %639
      %642 = vset.pattern.permute.xlu0 1
      %643 = vperm.xlu0 %642, %v260
      %v644 = vpop.permute.xlu0 %643
      %v646 = vmul.f32 %v614, %v632
      %v647 = vmul.f32 %v615, %v632
      %v648 = vmul.f32 %v616, %v632
      %v649 = vmul.f32 %v617, %v632
      %v650 = vmul.f32 %v618, %v636
      %v651 = vmul.f32 %v619, %v636
      %v652 = vmul.f32 %v620, %v636
      %v653 = vmul.f32 %v621, %v636
      %v654 = vmul.f32 %v622, %v640
      %v655 = vmul.f32 %v623, %v640
      %v656 = vmul.f32 %v624, %v640
      %v657 = vmul.f32 %v625, %v640
      %v658 = vmul.f32 %v626, %v644
      %v659 = vmul.f32 %v627, %v644
      %v660 = vmul.f32 %v628, %v644
      %v661 = vmul.f32 %v629, %v644
      %662 = vset.pattern.permute.xlu0 2
      %663 = vperm.xlu0 %662, %v257
      %v664 = vpop.permute.xlu0 %663
      %666 = vset.pattern.permute.xlu0 2
      %667 = vperm.xlu0 %666, %v258
      %v668 = vpop.permute.xlu0 %667
      %670 = vset.pattern.permute.xlu0 2
      %671 = vperm.xlu0 %670, %v259
      %v672 = vpop.permute.xlu0 %671
      %674 = vset.pattern.permute.xlu0 2
      %675 = vperm.xlu0 %674, %v260
      %v676 = vpop.permute.xlu0 %675
      %v678 = vadd.f32 %v646, %v664
      %v679 = vadd.f32 %v647, %v664
      %v680 = vadd.f32 %v648, %v664
      %v681 = vadd.f32 %v649, %v664
      %v682 = vadd.f32 %v650, %v668
      %v683 = vadd.f32 %v651, %v668
      %v684 = vadd.f32 %v652, %v668
      %v685 = vadd.f32 %v653, %v668
      %v686 = vadd.f32 %v654, %v672
      %v687 = vadd.f32 %v655, %v672
      %v688 = vadd.f32 %v656, %v672
      %v689 = vadd.f32 %v657, %v672
      %v690 = vadd.f32 %v658, %v676
      %v691 = vadd.f32 %v659, %v676
      %v692 = vadd.f32 %v660, %v676
      %v693 = vadd.f32 %v661, %v676
      %v694 = vmax.f32 %v678, 0.0
      %v695 = vmax.f32 %v679, 0.0
      %v696 = vmax.f32 %v680, 0.0
      %v697 = vmax.f32 %v681, 0.0
      %v698 = vmax.f32 %v682, 0.0
      %v699 = vmax.f32 %v683, 0.0
      %v700 = vmax.f32 %v684, 0.0
      %v701 = vmax.f32 %v685, 0.0
      %v702 = vmax.f32 %v686, 0.0
      %v703 = vmax.f32 %v687, 0.0
      %v704 = vmax.f32 %v688, 0.0
      %v705 = vmax.f32 %v689, 0.0
      %v706 = vmax.f32 %v690, 0.0
      %v707 = vmax.f32 %v691, 0.0
      %v708 = vmax.f32 %v692, 0.0
      %v709 = vmax.f32 %v693, 0.0
      %710 = vset.pattern.permute.xlu0 3
      %711 = vperm.xlu0 %710, %v257
      %v712 = vpop.permute.xlu0 %711
      %714 = vset.pattern.permute.xlu0 3
      %715 = vperm.xlu0 %714, %v258
      %v716 = vpop.permute.xlu0 %715
      %718 = vset.pattern.permute.xlu0 3
      %719 = vperm.xlu0 %718, %v259
      %v720 = vpop.permute.xlu0 %719
      %722 = vset.pattern.permute.xlu0 3
      %723 = vperm.xlu0 %722, %v260
      %v724 = vpop.permute.xlu0 %723
      %vm726 = vcmask 261120
      %v728 = vsel %vm726, %v489, 0
      %v731 = vsel %vm726, %v490, 0
      %v734 = vsel %vm726, %v491, 0
      %v737 = vsel %vm726, %v492, 0
      %739 = vmatprep.subr.mxu0 %v695
      %740 = vmatpush1.msra.mxu0 %v694
      %741 = vmatprep.subr.mxu0 %v699
      %742 = vmatpush1.msra.mxu0 %v698
      %743 = vmatprep.subr.mxu0 %v703
      %744 = vmatpush1.msra.mxu0 %v702
      %745 = vmatprep.subr.mxu0 %v707
      %746 = vmatpush1.msra.mxu0 %v706
      %747 = vmatprep.subr.mxu0 0.0
      %748 = vmatpush1.msra.mxu0 0.0
      %749 = vmatprep.subr.mxu0 0.0
      %750 = vmatpush1.msra.mxu0 0.0
      %751 = vmatprep.subr.mxu0 0.0
      %752 = vmatpush1.msra.mxu0 0.0
      %753 = vmatprep.subr.mxu0 0.0
      %754 = vmatpush1.msra.mxu0 0.0
      %755 = vmatprep.subr.mxu0 0.0
      %756 = vmatpush1.msra.mxu0 0.0
      %757 = vmatprep.subr.mxu0 0.0
      %758 = vmatpush1.msra.mxu0 0.0
      %759 = vmatprep.subr.mxu0 0.0
      %760 = vmatpush1.msra.mxu0 0.0
      %761 = vmatprep.subr.mxu0 0.0
      %762 = vmatpush1.msra.mxu0 0.0
      %763 = vmatprep.subr.mxu0 0.0
      %764 = vmatpush1.msra.mxu0 0.0
      %765 = vmatprep.subr.mxu0 0.0
      %766 = vmatpush1.msra.mxu0 0.0
      %767 = vmatprep.subr.mxu0 0.0
      %768 = vmatpush1.msra.mxu0 0.0
      %769 = vmatprep.subr.mxu0 0.0
      %770 = vmatpush1.msra.mxu0 0.0
      %771 = vmatprep.subr.mxu0 0.0
      %772 = vmatpush1.msra.mxu0 0.0
      %773 = vmatprep.subr.mxu0 0.0
      %774 = vmatpush1.msra.mxu0 0.0
      %775 = vmatprep.subr.mxu0 0.0
      %776 = vmatpush1.msra.mxu0 0.0
      %777 = vmatprep.subr.mxu0 0.0
      %778 = vmatpush1.msra.mxu0 0.0
      %779 = vmatprep.subr.mxu0 0.0
      %780 = vmatpush1.msra.mxu0 0.0
      %781 = vmatprep.subr.mxu0 0.0
      %782 = vmatpush1.msra.mxu0 0.0
      %783 = vmatprep.subr.mxu0 0.0
      %784 = vmatpush1.msra.mxu0 0.0
      %785 = vmatprep.subr.mxu0 0.0
      %786 = vmatpush1.msra.mxu0 0.0
      %787 = vmatprep.subr.mxu0 0.0
      %788 = vmatpush1.msra.mxu0 0.0
      %789 = vmatprep.subr.mxu0 0.0
      %790 = vmatpush1.msra.mxu0 0.0
      %791 = vmatprep.subr.mxu0 0.0
      %792 = vmatpush1.msra.mxu0 0.0
      %793 = vmatprep.subr.mxu0 0.0
      %794 = vmatpush1.msra.mxu0 0.0
      %795 = vmatprep.subr.mxu0 0.0
      %796 = vmatpush1.msra.mxu0 0.0
      %797 = vmatprep.subr.mxu0 0.0
      %798 = vmatpush1.msra.mxu0 0.0
      %799 = vmatprep.subr.mxu0 0.0
      %800 = vmatpush1.msra.mxu0 0.0
      %801 = vmatprep.subr.mxu0 0.0
      %802 = vmatpush1.msra.mxu0 0.0
      %803 = vmatprep.mubr.f32.mxu0 0.0
      %804 = vmatmul.mubr.f32.gmra.mrb[0].mxu0 %v728
      %v805 = vpop.f32.mrb[0].mxu0
      %v806 = vadd.f32 %v712, %v805
      %v807 = vpop.f32.mrb[0].mxu0
      %v808 = vadd.f32 %v712, %v807
      %809 = vmatprep.mubr.f32.mxu0 0.0
      %810 = vmatmul.mubr.f32.gmra.mrb[0].mxu0 %v731
      %v811 = vpop.f32.mrb[0].mxu0
      %v812 = vadd.f32 %v716, %v811
      %v813 = vpop.f32.mrb[0].mxu0
      %v814 = vadd.f32 %v716, %v813
      %815 = vmatprep.mubr.f32.mxu0 0.0
      %816 = vmatmul.mubr.f32.gmra.mrb[0].mxu0 %v734
      %v817 = vpop.f32.mrb[0].mxu0
      %v818 = vadd.f32 %v720, %v817
      %v819 = vpop.f32.mrb[0].mxu0
      %v820 = vadd.f32 %v720, %v819
      %821 = vmatprep.mubr.f32.mxu0 0.0
      %822 = vmatmul.mubr.f32.gmra.mrb[0].mxu0 %v737
      %v823 = vpop.f32.mrb[0].mxu0
      %v824 = vadd.f32 %v724, %v823
      %v825 = vpop.f32.mrb[0].mxu0
      %v826 = vadd.f32 %v724, %v825
      %827 = vdwg.mxu0
      %828 = vmatprep.subr.mxu0 %v697
      %829 = vmatpush1.msra.mxu0 %v696
      %830 = vmatprep.subr.mxu0 %v701
      %831 = vmatpush1.msra.mxu0 %v700
      %832 = vmatprep.subr.mxu0 %v705
      %833 = vmatpush1.msra.mxu0 %v704
      %834 = vmatprep.subr.mxu0 %v709
      %835 = vmatpush1.msra.mxu0 %v708
      %836 = vmatprep.subr.mxu0 0.0
      %837 = vmatpush1.msra.mxu0 0.0
      %838 = vmatprep.subr.mxu0 0.0
      %839 = vmatpush1.msra.mxu0 0.0
      %840 = vmatprep.subr.mxu0 0.0
      %841 = vmatpush1.msra.mxu0 0.0
      %842 = vmatprep.subr.mxu0 0.0
      %843 = vmatpush1.msra.mxu0 0.0
      %844 = vmatprep.subr.mxu0 0.0
      %845 = vmatpush1.msra.mxu0 0.0
      %846 = vmatprep.subr.mxu0 0.0
      %847 = vmatpush1.msra.mxu0 0.0
      %848 = vmatprep.subr.mxu0 0.0
      %849 = vmatpush1.msra.mxu0 0.0
      %850 = vmatprep.subr.mxu0 0.0
      %851 = vmatpush1.msra.mxu0 0.0
      %852 = vmatprep.subr.mxu0 0.0
      %853 = vmatpush1.msra.mxu0 0.0
      %854 = vmatprep.subr.mxu0 0.0
      %855 = vmatpush1.msra.mxu0 0.0
      %856 = vmatprep.subr.mxu0 0.0
      %857 = vmatpush1.msra.mxu0 0.0
      %858 = vmatprep.subr.mxu0 0.0
      %859 = vmatpush1.msra.mxu0 0.0
      %860 = vmatprep.subr.mxu0 0.0
      %861 = vmatpush1.msra.mxu0 0.0
      %862 = vmatprep.subr.mxu0 0.0
      %863 = vmatpush1.msra.mxu0 0.0
      %864 = vmatprep.subr.mxu0 0.0
      %865 = vmatpush1.msra.mxu0 0.0
      %866 = vmatprep.subr.mxu0 0.0
      %867 = vmatpush1.msra.mxu0 0.0
      %868 = vmatprep.subr.mxu0 0.0
      %869 = vmatpush1.msra.mxu0 0.0
      %870 = vmatprep.subr.mxu0 0.0
      %871 = vmatpush1.msra.mxu0 0.0
      %872 = vmatprep.subr.mxu0 0.0
      %873 = vmatpush1.msra.mxu0 0.0
      %874 = vmatprep.subr.mxu0 0.0
      %875 = vmatpush1.msra.mxu0 0.0
      %876 = vmatprep.subr.mxu0 0.0
      %877 = vmatpush1.msra.mxu0 0.0
      %878 = vmatprep.subr.mxu0 0.0
      %879 = vmatpush1.msra.mxu0 0.0
      %880 = vmatprep.subr.mxu0 0.0
      %881 = vmatpush1.msra.mxu0 0.0
      %882 = vmatprep.subr.mxu0 0.0
      %883 = vmatpush1.msra.mxu0 0.0
      %884 = vmatprep.subr.mxu0 0.0
      %885 = vmatpush1.msra.mxu0 0.0
      %886 = vmatprep.subr.mxu0 0.0
      %887 = vmatpush1.msra.mxu0 0.0
      %888 = vmatprep.subr.mxu0 0.0
      %889 = vmatpush1.msra.mxu0 0.0
      %890 = vmatprep.subr.mxu0 0.0
      %891 = vmatpush1.msra.mxu0 0.0
      %892 = vmatprep.mubr.f32.mxu0 0.0
      %893 = vmatmul.mubr.f32.gmra.mrb[0].mxu0 %v728
      %v894 = vpop.f32.mrb[0].mxu0
      %v895 = vadd.f32 %v712, %v894
      %v896 = vpop.f32.mrb[0].mxu0
      %v897 = vadd.f32 %v712, %v896
      %898 = vmatprep.mubr.f32.mxu0 0.0
      %899 = vmatmul.mubr.f32.gmra.mrb[0].mxu0 %v731
      %v900 = vpop.f32.mrb[0].mxu0
      %v901 = vadd.f32 %v716, %v900
      %v902 = vpop.f32.mrb[0].mxu0
      %v903 = vadd.f32 %v716, %v902
      %904 = vmatprep.mubr.f32.mxu0 0.0
      %905 = vmatmul.mubr.f32.gmra.mrb[0].mxu0 %v734
      %v906 = vpop.f32.mrb[0].mxu0
      %v907 = vadd.f32 %v720, %v906
      %v908 = vpop.f32.mrb[0].mxu0
      %v909 = vadd.f32 %v720, %v908
      %910 = vmatprep.mubr.f32.mxu0 0.0
      %911 = vmatmul.mubr.f32.gmra.mrb[0].mxu0 %v737
      %v912 = vpop.f32.mrb[0].mxu0
      %v913 = vadd.f32 %v724, %v912
      %v914 = vpop.f32.mrb[0].mxu0
      %v915 = vadd.f32 %v724, %v914
      %916 = vdwg.mxu0
      %s917 = scalar_lea.vmem %s2, 32
      %v918 = vld [vmem:[%s917] sm:$0xff]
      %v919 = vld [vmem:[%s917 + $0x8] sm:$0xff]
      %v920 = vld [vmem:[%s917 + $0x10] sm:$0xff]
      %v921 = vld [vmem:[%s917 + $0x18] sm:$0xff]
      %v922 = vadd.f32 %v806, %v812
      %v923 = vadd.f32 %v922, %v818
      %v924 = vadd.f32 %v923, %v824
      %v925 = vrot.slane %v924, 4
      %v926 = vadd.f32 %v924, %v925
      %v927 = vrot.slane %v926, 2
      %v928 = vadd.f32 %v926, %v927
      %v929 = vrot.slane %v928, 1
      %v930 = vadd.f32 %v928, %v929
      %v931 = vadd.f32 %v808, %v814
      %v932 = vadd.f32 %v931, %v820
      %v933 = vadd.f32 %v932, %v826
      %v934 = vrot.slane %v933, 4
      %v935 = vadd.f32 %v933, %v934
      %v936 = vrot.slane %v935, 2
      %v937 = vadd.f32 %v935, %v936
      %v938 = vrot.slane %v937, 1
      %v939 = vadd.f32 %v937, %v938
      %v940 = vadd.f32 %v895, %v901
      %v941 = vadd.f32 %v940, %v907
      %v942 = vadd.f32 %v941, %v913
      %v943 = vrot.slane %v942, 4
      %v944 = vadd.f32 %v942, %v943
      %v945 = vrot.slane %v944, 2
      %v946 = vadd.f32 %v944, %v945
      %v947 = vrot.slane %v946, 1
      %v948 = vadd.f32 %v946, %v947
      %v949 = vadd.f32 %v897, %v903
      %v950 = vadd.f32 %v949, %v909
      %v951 = vadd.f32 %v950, %v915
      %v952 = vrot.slane %v951, 4
      %v953 = vadd.f32 %v951, %v952
      %v954 = vrot.slane %v953, 2
      %v955 = vadd.f32 %v953, %v954
      %v956 = vrot.slane %v955, 1
      %v957 = vadd.f32 %v955, %v956
      %v958 = vmul.f32 %v930, %v529
      %v959 = vmul.f32 %v939, %v529
      %v960 = vmul.f32 %v948, %v529
      %v961 = vmul.f32 %v957, %v529
      %v962 = vsub.f32 %v806, %v958
      %v963 = vsub.f32 %v808, %v959
      %v964 = vsub.f32 %v895, %v960
      %v965 = vsub.f32 %v897, %v961
      %v966 = vsub.f32 %v812, %v958
      %v967 = vsub.f32 %v814, %v959
      %v968 = vsub.f32 %v901, %v960
      %v969 = vsub.f32 %v903, %v961
      %v970 = vsub.f32 %v818, %v958
      %v971 = vsub.f32 %v820, %v959
      %v972 = vsub.f32 %v907, %v960
      %v973 = vsub.f32 %v909, %v961
      %v974 = vsub.f32 %v824, %v958
      %v975 = vsub.f32 %v826, %v959
      %v976 = vsub.f32 %v913, %v960
      %v977 = vsub.f32 %v915, %v961
      %v978 = vmul.f32 %v962, %v962
      %v979 = vmul.f32 %v963, %v963
      %v980 = vmul.f32 %v964, %v964
      %v981 = vmul.f32 %v965, %v965
      %v982 = vmul.f32 %v966, %v966
      %v983 = vmul.f32 %v967, %v967
      %v984 = vmul.f32 %v968, %v968
      %v985 = vmul.f32 %v969, %v969
      %v986 = vmul.f32 %v970, %v970
      %v987 = vmul.f32 %v971, %v971
      %v988 = vmul.f32 %v972, %v972
      %v989 = vmul.f32 %v973, %v973
      %v990 = vmul.f32 %v974, %v974
      %v991 = vmul.f32 %v975, %v975
      %v992 = vmul.f32 %v976, %v976
      %v993 = vmul.f32 %v977, %v977
      %v994 = vadd.f32 %v978, %v982
      %v995 = vadd.f32 %v994, %v986
      %v996 = vadd.f32 %v995, %v990
      %v997 = vrot.slane %v996, 4
      %v998 = vadd.f32 %v996, %v997
      %v999 = vrot.slane %v998, 2
      %v1000 = vadd.f32 %v998, %v999
      %v1001 = vrot.slane %v1000, 1
      %v1002 = vadd.f32 %v1000, %v1001
      %v1003 = vadd.f32 %v979, %v983
      %v1004 = vadd.f32 %v1003, %v987
      %v1005 = vadd.f32 %v1004, %v991
      %v1006 = vrot.slane %v1005, 4
      %v1007 = vadd.f32 %v1005, %v1006
      %v1008 = vrot.slane %v1007, 2
      %v1009 = vadd.f32 %v1007, %v1008
      %v1010 = vrot.slane %v1009, 1
      %v1011 = vadd.f32 %v1009, %v1010
      %v1012 = vadd.f32 %v980, %v984
      %v1013 = vadd.f32 %v1012, %v988
      %v1014 = vadd.f32 %v1013, %v992
      %v1015 = vrot.slane %v1014, 4
      %v1016 = vadd.f32 %v1014, %v1015
      %v1017 = vrot.slane %v1016, 2
      %v1018 = vadd.f32 %v1016, %v1017
      %v1019 = vrot.slane %v1018, 1
      %v1020 = vadd.f32 %v1018, %v1019
      %v1021 = vadd.f32 %v981, %v985
      %v1022 = vadd.f32 %v1021, %v989
      %v1023 = vadd.f32 %v1022, %v993
      %v1024 = vrot.slane %v1023, 4
      %v1025 = vadd.f32 %v1023, %v1024
      %v1026 = vrot.slane %v1025, 2
      %v1027 = vadd.f32 %v1025, %v1026
      %v1028 = vrot.slane %v1027, 1
      %v1029 = vadd.f32 %v1027, %v1028
      %v1030 = vmul.f32 %v1002, %v529
      %v1031 = vmul.f32 %v1011, %v529
      %v1032 = vmul.f32 %v1020, %v529
      %v1033 = vmul.f32 %v1029, %v529
      %v1034 = vadd.f32 %v1030, 1e-05
      %v1035 = vadd.f32 %v1031, 1e-05
      %v1036 = vadd.f32 %v1032, 1e-05
      %v1037 = vadd.f32 %v1033, 1e-05
      %v1038 = vrsqrt.pop %v1034
      %v1039 = vrsqrt.pop %v1035
      %v1040 = vrsqrt.pop %v1036
      %v1041 = vrsqrt.pop %v1037
      %v1042 = vmul.f32 %v962, %v1038
      %v1043 = vmul.f32 %v963, %v1039
      %v1044 = vmul.f32 %v964, %v1040
      %v1045 = vmul.f32 %v965, %v1041
      %v1046 = vmul.f32 %v966, %v1038
      %v1047 = vmul.f32 %v967, %v1039
      %v1048 = vmul.f32 %v968, %v1040
      %v1049 = vmul.f32 %v969, %v1041
      %v1050 = vmul.f32 %v970, %v1038
      %v1051 = vmul.f32 %v971, %v1039
      %v1052 = vmul.f32 %v972, %v1040
      %v1053 = vmul.f32 %v973, %v1041
      %v1054 = vmul.f32 %v974, %v1038
      %v1055 = vmul.f32 %v975, %v1039
      %v1056 = vmul.f32 %v976, %v1040
      %v1057 = vmul.f32 %v977, %v1041
      %1058 = vset.pattern.permute.xlu0 4
      %1059 = vperm.xlu0 %1058, %v257
      %v1060 = vpop.permute.xlu0 %1059
      %1062 = vset.pattern.permute.xlu0 4
      %1063 = vperm.xlu0 %1062, %v258
      %v1064 = vpop.permute.xlu0 %1063
      %1066 = vset.pattern.permute.xlu0 4
      %1067 = vperm.xlu0 %1066, %v259
      %v1068 = vpop.permute.xlu0 %1067
      %1070 = vset.pattern.permute.xlu0 4
      %1071 = vperm.xlu0 %1070, %v260
      %v1072 = vpop.permute.xlu0 %1071
      %v1074 = vmul.f32 %v1042, %v1060
      %v1075 = vmul.f32 %v1043, %v1060
      %v1076 = vmul.f32 %v1044, %v1060
      %v1077 = vmul.f32 %v1045, %v1060
      %v1078 = vmul.f32 %v1046, %v1064
      %v1079 = vmul.f32 %v1047, %v1064
      %v1080 = vmul.f32 %v1048, %v1064
      %v1081 = vmul.f32 %v1049, %v1064
      %v1082 = vmul.f32 %v1050, %v1068
      %v1083 = vmul.f32 %v1051, %v1068
      %v1084 = vmul.f32 %v1052, %v1068
      %v1085 = vmul.f32 %v1053, %v1068
      %v1086 = vmul.f32 %v1054, %v1072
      %v1087 = vmul.f32 %v1055, %v1072
      %v1088 = vmul.f32 %v1056, %v1072
      %v1089 = vmul.f32 %v1057, %v1072
      %1090 = vset.pattern.permute.xlu0 5
      %1091 = vperm.xlu0 %1090, %v257
      %v1092 = vpop.permute.xlu0 %1091
      %1094 = vset.pattern.permute.xlu0 5
      %1095 = vperm.xlu0 %1094, %v258
      %v1096 = vpop.permute.xlu0 %1095
      %1098 = vset.pattern.permute.xlu0 5
      %1099 = vperm.xlu0 %1098, %v259
      %v1100 = vpop.permute.xlu0 %1099
      %1102 = vset.pattern.permute.xlu0 5
      %1103 = vperm.xlu0 %1102, %v260
      %v1104 = vpop.permute.xlu0 %1103
      %v1106 = vadd.f32 %v1074, %v1092
      %v1107 = vadd.f32 %v1075, %v1092
      %v1108 = vadd.f32 %v1076, %v1092
      %v1109 = vadd.f32 %v1077, %v1092
      %v1110 = vadd.f32 %v1078, %v1096
      %v1111 = vadd.f32 %v1079, %v1096
      %v1112 = vadd.f32 %v1080, %v1096
      %v1113 = vadd.f32 %v1081, %v1096
      %v1114 = vadd.f32 %v1082, %v1100
      %v1115 = vadd.f32 %v1083, %v1100
      %v1116 = vadd.f32 %v1084, %v1100
      %v1117 = vadd.f32 %v1085, %v1100
      %v1118 = vadd.f32 %v1086, %v1104
      %v1119 = vadd.f32 %v1087, %v1104
      %v1120 = vadd.f32 %v1088, %v1104
      %v1121 = vadd.f32 %v1089, %v1104
      %v1122 = vmax.f32 %v1106, 0.0
      %v1123 = vmax.f32 %v1107, 0.0
      %v1124 = vmax.f32 %v1108, 0.0
      %v1125 = vmax.f32 %v1109, 0.0
      %v1126 = vmax.f32 %v1110, 0.0
      %v1127 = vmax.f32 %v1111, 0.0
      %v1128 = vmax.f32 %v1112, 0.0
      %v1129 = vmax.f32 %v1113, 0.0
      %v1130 = vmax.f32 %v1114, 0.0
      %v1131 = vmax.f32 %v1115, 0.0
      %v1132 = vmax.f32 %v1116, 0.0
      %v1133 = vmax.f32 %v1117, 0.0
      %v1134 = vmax.f32 %v1118, 0.0
      %v1135 = vmax.f32 %v1119, 0.0
      %v1136 = vmax.f32 %v1120, 0.0
      %v1137 = vmax.f32 %v1121, 0.0
      %1138 = vset.pattern.permute.xlu0 6
      %1139 = vperm.xlu0 %1138, %v257
      %v1140 = vpop.permute.xlu0 %1139
      %1142 = vset.pattern.permute.xlu0 6
      %1143 = vperm.xlu0 %1142, %v258
      %v1144 = vpop.permute.xlu0 %1143
      %1146 = vset.pattern.permute.xlu0 6
      %1147 = vperm.xlu0 %1146, %v259
      %v1148 = vpop.permute.xlu0 %1147
      %1150 = vset.pattern.permute.xlu0 6
      %1151 = vperm.xlu0 %1150, %v260
      %v1152 = vpop.permute.xlu0 %1151
      %v1155 = vsel %vm726, %v918, 0
      %v1158 = vsel %vm726, %v919, 0
      %v1161 = vsel %vm726, %v920, 0
      %v1164 = vsel %vm726, %v921, 0
      %1166 = vmatprep.subr.mxu0 %v1123
      %1167 = vmatpush1.msra.mxu0 %v1122
      %1168 = vmatprep.subr.mxu0 %v1127
      %1169 = vmatpush1.msra.mxu0 %v1126
      %1170 = vmatprep.subr.mxu0 %v1131
      %1171 = vmatpush1.msra.mxu0 %v1130
      %1172 = vmatprep.subr.mxu0 %v1135
      %1173 = vmatpush1.msra.mxu0 %v1134
      %1174 = vmatprep.subr.mxu0 0.0
      %1175 = vmatpush1.msra.mxu0 0.0
      %1176 = vmatprep.subr.mxu0 0.0
      %1177 = vmatpush1.msra.mxu0 0.0
      %1178 = vmatprep.subr.mxu0 0.0
      %1179 = vmatpush1.msra.mxu0 0.0
      %1180 = vmatprep.subr.mxu0 0.0
      %1181 = vmatpush1.msra.mxu0 0.0
      %1182 = vmatprep.subr.mxu0 0.0
      %1183 = vmatpush1.msra.mxu0 0.0
      %1184 = vmatprep.subr.mxu0 0.0
      %1185 = vmatpush1.msra.mxu0 0.0
      %1186 = vmatprep.subr.mxu0 0.0
      %1187 = vmatpush1.msra.mxu0 0.0
      %1188 = vmatprep.subr.mxu0 0.0
      %1189 = vmatpush1.msra.mxu0 0.0
      %1190 = vmatprep.subr.mxu0 0.0
      %1191 = vmatpush1.msra.mxu0 0.0
      %1192 = vmatprep.subr.mxu0 0.0
      %1193 = vmatpush1.msra.mxu0 0.0
      %1194 = vmatprep.subr.mxu0 0.0
      %1195 = vmatpush1.msra.mxu0 0.0
      %1196 = vmatprep.subr.mxu0 0.0
      %1197 = vmatpush1.msra.mxu0 0.0
      %1198 = vmatprep.subr.mxu0 0.0
      %1199 = vmatpush1.msra.mxu0 0.0
      %1200 = vmatprep.subr.mxu0 0.0
      %1201 = vmatpush1.msra.mxu0 0.0
      %1202 = vmatprep.subr.mxu0 0.0
      %1203 = vmatpush1.msra.mxu0 0.0
      %1204 = vmatprep.subr.mxu0 0.0
      %1205 = vmatpush1.msra.mxu0 0.0
      %1206 = vmatprep.subr.mxu0 0.0
      %1207 = vmatpush1.msra.mxu0 0.0
      %1208 = vmatprep.subr.mxu0 0.0
      %1209 = vmatpush1.msra.mxu0 0.0
      %1210 = vmatprep.subr.mxu0 0.0
      %1211 = vmatpush1.msra.mxu0 0.0
      %1212 = vmatprep.subr.mxu0 0.0
      %1213 = vmatpush1.msra.mxu0 0.0
      %1214 = vmatprep.subr.mxu0 0.0
      %1215 = vmatpush1.msra.mxu0 0.0
      %1216 = vmatprep.subr.mxu0 0.0
      %1217 = vmatpush1.msra.mxu0 0.0
      %1218 = vmatprep.subr.mxu0 0.0
      %1219 = vmatpush1.msra.mxu0 0.0
      %1220 = vmatprep.subr.mxu0 0.0
      %1221 = vmatpush1.msra.mxu0 0.0
      %1222 = vmatprep.subr.mxu0 0.0
      %1223 = vmatpush1.msra.mxu0 0.0
      %1224 = vmatprep.subr.mxu0 0.0
      %1225 = vmatpush1.msra.mxu0 0.0
      %1226 = vmatprep.subr.mxu0 0.0
      %1227 = vmatpush1.msra.mxu0 0.0
      %1228 = vmatprep.subr.mxu0 0.0
      %1229 = vmatpush1.msra.mxu0 0.0
      %1230 = vmatprep.mubr.f32.mxu0 0.0
      %1231 = vmatmul.mubr.f32.gmra.mrb[0].mxu0 %v1155
      %v1232 = vpop.f32.mrb[0].mxu0
      %v1233 = vadd.f32 %v1140, %v1232
      %v1234 = vpop.f32.mrb[0].mxu0
      %v1235 = vadd.f32 %v1140, %v1234
      %1236 = vmatprep.mubr.f32.mxu0 0.0
      %1237 = vmatmul.mubr.f32.gmra.mrb[0].mxu0 %v1158
      %v1238 = vpop.f32.mrb[0].mxu0
      %v1239 = vadd.f32 %v1144, %v1238
      %v1240 = vpop.f32.mrb[0].mxu0
      %v1241 = vadd.f32 %v1144, %v1240
      %1242 = vmatprep.mubr.f32.mxu0 0.0
      %1243 = vmatmul.mubr.f32.gmra.mrb[0].mxu0 %v1161
      %v1244 = vpop.f32.mrb[0].mxu0
      %v1245 = vadd.f32 %v1148, %v1244
      %v1246 = vpop.f32.mrb[0].mxu0
      %v1247 = vadd.f32 %v1148, %v1246
      %1248 = vmatprep.mubr.f32.mxu0 0.0
      %1249 = vmatmul.mubr.f32.gmra.mrb[0].mxu0 %v1164
      %v1250 = vpop.f32.mrb[0].mxu0
      %v1251 = vadd.f32 %v1152, %v1250
      %v1252 = vpop.f32.mrb[0].mxu0
      %v1253 = vadd.f32 %v1152, %v1252
      %1254 = vdwg.mxu0
      %1255 = vmatprep.subr.mxu0 %v1125
      %1256 = vmatpush1.msra.mxu0 %v1124
      %1257 = vmatprep.subr.mxu0 %v1129
      %1258 = vmatpush1.msra.mxu0 %v1128
      %1259 = vmatprep.subr.mxu0 %v1133
      %1260 = vmatpush1.msra.mxu0 %v1132
      %1261 = vmatprep.subr.mxu0 %v1137
      %1262 = vmatpush1.msra.mxu0 %v1136
      %1263 = vmatprep.subr.mxu0 0.0
      %1264 = vmatpush1.msra.mxu0 0.0
      %1265 = vmatprep.subr.mxu0 0.0
      %1266 = vmatpush1.msra.mxu0 0.0
      %1267 = vmatprep.subr.mxu0 0.0
      %1268 = vmatpush1.msra.mxu0 0.0
      %1269 = vmatprep.subr.mxu0 0.0
      %1270 = vmatpush1.msra.mxu0 0.0
      %1271 = vmatprep.subr.mxu0 0.0
      %1272 = vmatpush1.msra.mxu0 0.0
      %1273 = vmatprep.subr.mxu0 0.0
      %1274 = vmatpush1.msra.mxu0 0.0
      %1275 = vmatprep.subr.mxu0 0.0
      %1276 = vmatpush1.msra.mxu0 0.0
      %1277 = vmatprep.subr.mxu0 0.0
      %1278 = vmatpush1.msra.mxu0 0.0
      %1279 = vmatprep.subr.mxu0 0.0
      %1280 = vmatpush1.msra.mxu0 0.0
      %1281 = vmatprep.subr.mxu0 0.0
      %1282 = vmatpush1.msra.mxu0 0.0
      %1283 = vmatprep.subr.mxu0 0.0
      %1284 = vmatpush1.msra.mxu0 0.0
      %1285 = vmatprep.subr.mxu0 0.0
      %1286 = vmatpush1.msra.mxu0 0.0
      %1287 = vmatprep.subr.mxu0 0.0
      %1288 = vmatpush1.msra.mxu0 0.0
      %1289 = vmatprep.subr.mxu0 0.0
      %1290 = vmatpush1.msra.mxu0 0.0
      %1291 = vmatprep.subr.mxu0 0.0
      %1292 = vmatpush1.msra.mxu0 0.0
      %1293 = vmatprep.subr.mxu0 0.0
      %1294 = vmatpush1.msra.mxu0 0.0
      %1295 = vmatprep.subr.mxu0 0.0
      %1296 = vmatpush1.msra.mxu0 0.0
      %1297 = vmatprep.subr.mxu0 0.0
      %1298 = vmatpush1.msra.mxu0 0.0
      %1299 = vmatprep.subr.mxu0 0.0
      %1300 = vmatpush1.msra.mxu0 0.0
      %1301 = vmatprep.subr.mxu0 0.0
      %1302 = vmatpush1.msra.mxu0 0.0
      %1303 = vmatprep.subr.mxu0 0.0
      %1304 = vmatpush1.msra.mxu0 0.0
      %1305 = vmatprep.subr.mxu0 0.0
      %1306 = vmatpush1.msra.mxu0 0.0
      %1307 = vmatprep.subr.mxu0 0.0
      %1308 = vmatpush1.msra.mxu0 0.0
      %1309 = vmatprep.subr.mxu0 0.0
      %1310 = vmatpush1.msra.mxu0 0.0
      %1311 = vmatprep.subr.mxu0 0.0
      %1312 = vmatpush1.msra.mxu0 0.0
      %1313 = vmatprep.subr.mxu0 0.0
      %1314 = vmatpush1.msra.mxu0 0.0
      %1315 = vmatprep.subr.mxu0 0.0
      %1316 = vmatpush1.msra.mxu0 0.0
      %1317 = vmatprep.subr.mxu0 0.0
      %1318 = vmatpush1.msra.mxu0 0.0
      %1319 = vmatprep.mubr.f32.mxu0 0.0
      %1320 = vmatmul.mubr.f32.gmra.mrb[0].mxu0 %v1155
      %v1321 = vpop.f32.mrb[0].mxu0
      %v1322 = vadd.f32 %v1140, %v1321
      %v1323 = vpop.f32.mrb[0].mxu0
      %v1324 = vadd.f32 %v1140, %v1323
      %1325 = vmatprep.mubr.f32.mxu0 0.0
      %1326 = vmatmul.mubr.f32.gmra.mrb[0].mxu0 %v1158
      %v1327 = vpop.f32.mrb[0].mxu0
      %v1328 = vadd.f32 %v1144, %v1327
      %v1329 = vpop.f32.mrb[0].mxu0
      %v1330 = vadd.f32 %v1144, %v1329
      %1331 = vmatprep.mubr.f32.mxu0 0.0
      %1332 = vmatmul.mubr.f32.gmra.mrb[0].mxu0 %v1161
      %v1333 = vpop.f32.mrb[0].mxu0
      %v1334 = vadd.f32 %v1148, %v1333
      %v1335 = vpop.f32.mrb[0].mxu0
      %v1336 = vadd.f32 %v1148, %v1335
      %1337 = vmatprep.mubr.f32.mxu0 0.0
      %1338 = vmatmul.mubr.f32.gmra.mrb[0].mxu0 %v1164
      %v1339 = vpop.f32.mrb[0].mxu0
      %v1340 = vadd.f32 %v1152, %v1339
      %v1341 = vpop.f32.mrb[0].mxu0
      %v1342 = vadd.f32 %v1152, %v1341
      %1343 = vdwg.mxu0
      %v1344 = vadd.f32 %v1233, %v1239
      %v1345 = vadd.f32 %v1344, %v1245
      %v1346 = vadd.f32 %v1345, %v1251
      %v1347 = vrot.slane %v1346, 4
      %v1348 = vadd.f32 %v1346, %v1347
      %v1349 = vrot.slane %v1348, 2
      %v1350 = vadd.f32 %v1348, %v1349
      %v1351 = vrot.slane %v1350, 1
      %v1352 = vadd.f32 %v1350, %v1351
      %v1353 = vadd.f32 %v1235, %v1241
      %v1354 = vadd.f32 %v1353, %v1247
      %v1355 = vadd.f32 %v1354, %v1253
      %v1356 = vrot.slane %v1355, 4
      %v1357 = vadd.f32 %v1355, %v1356
      %v1358 = vrot.slane %v1357, 2
      %v1359 = vadd.f32 %v1357, %v1358
      %v1360 = vrot.slane %v1359, 1
      %v1361 = vadd.f32 %v1359, %v1360
      %v1362 = vadd.f32 %v1322, %v1328
      %v1363 = vadd.f32 %v1362, %v1334
      %v1364 = vadd.f32 %v1363, %v1340
      %v1365 = vrot.slane %v1364, 4
      %v1366 = vadd.f32 %v1364, %v1365
      %v1367 = vrot.slane %v1366, 2
      %v1368 = vadd.f32 %v1366, %v1367
      %v1369 = vrot.slane %v1368, 1
      %v1370 = vadd.f32 %v1368, %v1369
      %v1371 = vadd.f32 %v1324, %v1330
      %v1372 = vadd.f32 %v1371, %v1336
      %v1373 = vadd.f32 %v1372, %v1342
      %v1374 = vrot.slane %v1373, 4
      %v1375 = vadd.f32 %v1373, %v1374
      %v1376 = vrot.slane %v1375, 2
      %v1377 = vadd.f32 %v1375, %v1376
      %v1378 = vrot.slane %v1377, 1
      %v1379 = vadd.f32 %v1377, %v1378
      %v1380 = vmul.f32 %v1352, %v529
      %v1381 = vmul.f32 %v1361, %v529
      %v1382 = vmul.f32 %v1370, %v529
      %v1383 = vmul.f32 %v1379, %v529
      %v1384 = vsub.f32 %v1233, %v1380
      %v1385 = vsub.f32 %v1235, %v1381
      %v1386 = vsub.f32 %v1322, %v1382
      %v1387 = vsub.f32 %v1324, %v1383
      %v1388 = vsub.f32 %v1239, %v1380
      %v1389 = vsub.f32 %v1241, %v1381
      %v1390 = vsub.f32 %v1328, %v1382
      %v1391 = vsub.f32 %v1330, %v1383
      %v1392 = vsub.f32 %v1245, %v1380
      %v1393 = vsub.f32 %v1247, %v1381
      %v1394 = vsub.f32 %v1334, %v1382
      %v1395 = vsub.f32 %v1336, %v1383
      %v1396 = vsub.f32 %v1251, %v1380
      %v1397 = vsub.f32 %v1253, %v1381
      %v1398 = vsub.f32 %v1340, %v1382
      %v1399 = vsub.f32 %v1342, %v1383
      %v1400 = vmul.f32 %v1384, %v1384
      %v1401 = vmul.f32 %v1385, %v1385
      %v1402 = vmul.f32 %v1386, %v1386
      %v1403 = vmul.f32 %v1387, %v1387
      %v1404 = vmul.f32 %v1388, %v1388
      %v1405 = vmul.f32 %v1389, %v1389
      %v1406 = vmul.f32 %v1390, %v1390
      %v1407 = vmul.f32 %v1391, %v1391
      %v1408 = vmul.f32 %v1392, %v1392
      %v1409 = vmul.f32 %v1393, %v1393
      %v1410 = vmul.f32 %v1394, %v1394
      %v1411 = vmul.f32 %v1395, %v1395
      %v1412 = vmul.f32 %v1396, %v1396
      %v1413 = vmul.f32 %v1397, %v1397
      %v1414 = vmul.f32 %v1398, %v1398
      %v1415 = vmul.f32 %v1399, %v1399
      %v1416 = vadd.f32 %v1400, %v1404
      %v1417 = vadd.f32 %v1416, %v1408
      %v1418 = vadd.f32 %v1417, %v1412
      %v1419 = vrot.slane %v1418, 4
      %v1420 = vadd.f32 %v1418, %v1419
      %v1421 = vrot.slane %v1420, 2
      %v1422 = vadd.f32 %v1420, %v1421
      %v1423 = vrot.slane %v1422, 1
      %v1424 = vadd.f32 %v1422, %v1423
      %v1425 = vadd.f32 %v1401, %v1405
      %v1426 = vadd.f32 %v1425, %v1409
      %v1427 = vadd.f32 %v1426, %v1413
      %v1428 = vrot.slane %v1427, 4
      %v1429 = vadd.f32 %v1427, %v1428
      %v1430 = vrot.slane %v1429, 2
      %v1431 = vadd.f32 %v1429, %v1430
      %v1432 = vrot.slane %v1431, 1
      %v1433 = vadd.f32 %v1431, %v1432
      %v1434 = vadd.f32 %v1402, %v1406
      %v1435 = vadd.f32 %v1434, %v1410
      %v1436 = vadd.f32 %v1435, %v1414
      %v1437 = vrot.slane %v1436, 4
      %v1438 = vadd.f32 %v1436, %v1437
      %v1439 = vrot.slane %v1438, 2
      %v1440 = vadd.f32 %v1438, %v1439
      %v1441 = vrot.slane %v1440, 1
      %v1442 = vadd.f32 %v1440, %v1441
      %v1443 = vadd.f32 %v1403, %v1407
      %v1444 = vadd.f32 %v1443, %v1411
      %v1445 = vadd.f32 %v1444, %v1415
      %v1446 = vrot.slane %v1445, 4
      %v1447 = vadd.f32 %v1445, %v1446
      %v1448 = vrot.slane %v1447, 2
      %v1449 = vadd.f32 %v1447, %v1448
      %v1450 = vrot.slane %v1449, 1
      %v1451 = vadd.f32 %v1449, %v1450
      %v1452 = vmul.f32 %v1424, %v529
      %v1453 = vmul.f32 %v1433, %v529
      %v1454 = vmul.f32 %v1442, %v529
      %v1455 = vmul.f32 %v1451, %v529
      %v1456 = vadd.f32 %v1452, 1e-05
      %v1457 = vadd.f32 %v1453, 1e-05
      %v1458 = vadd.f32 %v1454, 1e-05
      %v1459 = vadd.f32 %v1455, 1e-05
      %v1460 = vrsqrt.pop %v1456
      %v1461 = vrsqrt.pop %v1457
      %v1462 = vrsqrt.pop %v1458
      %v1463 = vrsqrt.pop %v1459
      %v1464 = vmul.f32 %v1384, %v1460
      %v1465 = vmul.f32 %v1385, %v1461
      %v1466 = vmul.f32 %v1386, %v1462
      %v1467 = vmul.f32 %v1387, %v1463
      %v1468 = vmul.f32 %v1388, %v1460
      %v1469 = vmul.f32 %v1389, %v1461
      %v1470 = vmul.f32 %v1390, %v1462
      %v1471 = vmul.f32 %v1391, %v1463
      %v1472 = vmul.f32 %v1392, %v1460
      %v1473 = vmul.f32 %v1393, %v1461
      %v1474 = vmul.f32 %v1394, %v1462
      %v1475 = vmul.f32 %v1395, %v1463
      %v1476 = vmul.f32 %v1396, %v1460
      %v1477 = vmul.f32 %v1397, %v1461
      %v1478 = vmul.f32 %v1398, %v1462
      %v1479 = vmul.f32 %v1399, %v1463
      %1480 = vset.pattern.permute.xlu0 7
      %1481 = vperm.xlu0 %1480, %v257
      %v1482 = vpop.permute.xlu0 %1481
      %1484 = vset.pattern.permute.xlu0 7
      %1485 = vperm.xlu0 %1484, %v258
      %v1486 = vpop.permute.xlu0 %1485
      %1488 = vset.pattern.permute.xlu0 7
      %1489 = vperm.xlu0 %1488, %v259
      %v1490 = vpop.permute.xlu0 %1489
      %1492 = vset.pattern.permute.xlu0 7
      %1493 = vperm.xlu0 %1492, %v260
      %v1494 = vpop.permute.xlu0 %1493
      %v1496 = vmul.f32 %v1464, %v1482
      %v1497 = vmul.f32 %v1465, %v1482
      %v1498 = vmul.f32 %v1466, %v1482
      %v1499 = vmul.f32 %v1467, %v1482
      %v1500 = vmul.f32 %v1468, %v1486
      %v1501 = vmul.f32 %v1469, %v1486
      %v1502 = vmul.f32 %v1470, %v1486
      %v1503 = vmul.f32 %v1471, %v1486
      %v1504 = vmul.f32 %v1472, %v1490
      %v1505 = vmul.f32 %v1473, %v1490
      %v1506 = vmul.f32 %v1474, %v1490
      %v1507 = vmul.f32 %v1475, %v1490
      %v1508 = vmul.f32 %v1476, %v1494
      %v1509 = vmul.f32 %v1477, %v1494
      %v1510 = vmul.f32 %v1478, %v1494
      %v1511 = vmul.f32 %v1479, %v1494
      %1512 = vset.pattern.permute.xlu0 8
      %1513 = vperm.xlu0 %1512, %v257
      %v1514 = vpop.permute.xlu0 %1513
      %1516 = vset.pattern.permute.xlu0 8
      %1517 = vperm.xlu0 %1516, %v258
      %v1518 = vpop.permute.xlu0 %1517
      %1520 = vset.pattern.permute.xlu0 8
      %1521 = vperm.xlu0 %1520, %v259
      %v1522 = vpop.permute.xlu0 %1521
      %1524 = vset.pattern.permute.xlu0 8
      %1525 = vperm.xlu0 %1524, %v260
      %v1526 = vpop.permute.xlu0 %1525
      %v1528 = vadd.f32 %v1496, %v1514
      %v1529 = vadd.f32 %v1497, %v1514
      %v1530 = vadd.f32 %v1498, %v1514
      %v1531 = vadd.f32 %v1499, %v1514
      %v1532 = vadd.f32 %v1500, %v1518
      %v1533 = vadd.f32 %v1501, %v1518
      %v1534 = vadd.f32 %v1502, %v1518
      %v1535 = vadd.f32 %v1503, %v1518
      %v1536 = vadd.f32 %v1504, %v1522
      %v1537 = vadd.f32 %v1505, %v1522
      %v1538 = vadd.f32 %v1506, %v1522
      %v1539 = vadd.f32 %v1507, %v1522
      %v1540 = vadd.f32 %v1508, %v1526
      %v1541 = vadd.f32 %v1509, %v1526
      %v1542 = vadd.f32 %v1510, %v1526
      %v1543 = vadd.f32 %v1511, %v1526
      %v1544 = vmax.f32 %v1528, 0.0
      %v1545 = vmax.f32 %v1529, 0.0
      %v1546 = vmax.f32 %v1530, 0.0
      %v1547 = vmax.f32 %v1531, 0.0
      %v1548 = vmax.f32 %v1532, 0.0
      %v1549 = vmax.f32 %v1533, 0.0
      %v1550 = vmax.f32 %v1534, 0.0
      %v1551 = vmax.f32 %v1535, 0.0
      %v1552 = vmax.f32 %v1536, 0.0
      %v1553 = vmax.f32 %v1537, 0.0
      %v1554 = vmax.f32 %v1538, 0.0
      %v1555 = vmax.f32 %v1539, 0.0
      %v1556 = vmax.f32 %v1540, 0.0
      %v1557 = vmax.f32 %v1541, 0.0
      %v1558 = vmax.f32 %v1542, 0.0
      %v1559 = vmax.f32 %v1543, 0.0
      %v1560 = vld [vmem:[%s3] sm:$0x1]
      %v1561 = vld [vmem:[#allocation2] sm:$0x1]
      %1563 = vset.pattern.permute.xlu0 0
      %1564 = vperm.xlu0 %1563, %v1561
      %v1565 = vpop.permute.xlu0 %1564
      %v1567 = vlaneseq
      %v1568 = vshrl.u32 %v1567, 7
      %v1569 = vsub.s32 0, %v1568
      %v1570 = vrot.slane %v1565, %v1569
      %v1572 = vsel %vm726, %v1560, 0
      %1574 = vmatprep.subr.mxu0 %v1545
      %1575 = vmatpush1.msra.mxu0 %v1544
      %1576 = vmatprep.subr.mxu0 %v1549
      %1577 = vmatpush1.msra.mxu0 %v1548
      %1578 = vmatprep.subr.mxu0 %v1553
      %1579 = vmatpush1.msra.mxu0 %v1552
      %1580 = vmatprep.subr.mxu0 %v1557
      %1581 = vmatpush1.msra.mxu0 %v1556
      %1582 = vmatprep.subr.mxu0 0.0
      %1583 = vmatpush1.msra.mxu0 0.0
      %1584 = vmatprep.subr.mxu0 0.0
      %1585 = vmatpush1.msra.mxu0 0.0
      %1586 = vmatprep.subr.mxu0 0.0
      %1587 = vmatpush1.msra.mxu0 0.0
      %1588 = vmatprep.subr.mxu0 0.0
      %1589 = vmatpush1.msra.mxu0 0.0
      %1590 = vmatprep.subr.mxu0 0.0
      %1591 = vmatpush1.msra.mxu0 0.0
      %1592 = vmatprep.subr.mxu0 0.0
      %1593 = vmatpush1.msra.mxu0 0.0
      %1594 = vmatprep.subr.mxu0 0.0
      %1595 = vmatpush1.msra.mxu0 0.0
      %1596 = vmatprep.subr.mxu0 0.0
      %1597 = vmatpush1.msra.mxu0 0.0
      %1598 = vmatprep.subr.mxu0 0.0
      %1599 = vmatpush1.msra.mxu0 0.0
      %1600 = vmatprep.subr.mxu0 0.0
      %1601 = vmatpush1.msra.mxu0 0.0
      %1602 = vmatprep.subr.mxu0 0.0
      %1603 = vmatpush1.msra.mxu0 0.0
      %1604 = vmatprep.subr.mxu0 0.0
      %1605 = vmatpush1.msra.mxu0 0.0
      %1606 = vmatprep.subr.mxu0 0.0
      %1607 = vmatpush1.msra.mxu0 0.0
      %1608 = vmatprep.subr.mxu0 0.0
      %1609 = vmatpush1.msra.mxu0 0.0
      %1610 = vmatprep.subr.mxu0 0.0
      %1611 = vmatpush1.msra.mxu0 0.0
      %1612 = vmatprep.subr.mxu0 0.0
      %1613 = vmatpush1.msra.mxu0 0.0
      %1614 = vmatprep.subr.mxu0 0.0
      %1615 = vmatpush1.msra.mxu0 0.0
      %1616 = vmatprep.subr.mxu0 0.0
      %1617 = vmatpush1.msra.mxu0 0.0
      %1618 = vmatprep.subr.mxu0 0.0
      %1619 = vmatpush1.msra.mxu0 0.0
      %1620 = vmatprep.subr.mxu0 0.0
      %1621 = vmatpush1.msra.mxu0 0.0
      %1622 = vmatprep.subr.mxu0 0.0
      %1623 = vmatpush1.msra.mxu0 0.0
      %1624 = vmatprep.subr.mxu0 0.0
      %1625 = vmatpush1.msra.mxu0 0.0
      %1626 = vmatprep.subr.mxu0 0.0
      %1627 = vmatpush1.msra.mxu0 0.0
      %1628 = vmatprep.subr.mxu0 0.0
      %1629 = vmatpush1.msra.mxu0 0.0
      %1630 = vmatprep.subr.mxu0 0.0
      %1631 = vmatpush1.msra.mxu0 0.0
      %1632 = vmatprep.subr.mxu0 0.0
      %1633 = vmatpush1.msra.mxu0 0.0
      %1634 = vmatprep.subr.mxu0 0.0
      %1635 = vmatpush1.msra.mxu0 0.0
      %1636 = vmatprep.subr.mxu0 0.0
      %1637 = vmatpush1.msra.mxu0 0.0
      %1638 = vmatprep.mubr.f32.mxu0 0.0
      %1639 = vmatmul.mubr.f32.gmra.mrb[0].mxu0 %v1572
      %v1640 = vpop.f32.mrb[0].mxu0
      %v1641 = vadd.f32 %v1570, %v1640
      %v1642 = vpop.f32.mrb[0].mxu0
      %v1643 = vadd.f32 %v1570, %v1642
      %1644 = vdwg.mxu0
      %1645 = vmatprep.subr.mxu0 %v1547
      %1646 = vmatpush1.msra.mxu0 %v1546
      %1647 = vmatprep.subr.mxu0 %v1551
      %1648 = vmatpush1.msra.mxu0 %v1550
      %1649 = vmatprep.subr.mxu0 %v1555
      %1650 = vmatpush1.msra.mxu0 %v1554
      %1651 = vmatprep.subr.mxu0 %v1559
      %1652 = vmatpush1.msra.mxu0 %v1558
      %1653 = vmatprep.subr.mxu0 0.0
      %1654 = vmatpush1.msra.mxu0 0.0
      %1655 = vmatprep.subr.mxu0 0.0
      %1656 = vmatpush1.msra.mxu0 0.0
      %1657 = vmatprep.subr.mxu0 0.0
      %1658 = vmatpush1.msra.mxu0 0.0
      %1659 = vmatprep.subr.mxu0 0.0
      %1660 = vmatpush1.msra.mxu0 0.0
      %1661 = vmatprep.subr.mxu0 0.0
      %1662 = vmatpush1.msra.mxu0 0.0
      %1663 = vmatprep.subr.mxu0 0.0
      %1664 = vmatpush1.msra.mxu0 0.0
      %1665 = vmatprep.subr.mxu0 0.0
      %1666 = vmatpush1.msra.mxu0 0.0
      %1667 = vmatprep.subr.mxu0 0.0
      %1668 = vmatpush1.msra.mxu0 0.0
      %1669 = vmatprep.subr.mxu0 0.0
      %1670 = vmatpush1.msra.mxu0 0.0
      %1671 = vmatprep.subr.mxu0 0.0
      %1672 = vmatpush1.msra.mxu0 0.0
      %1673 = vmatprep.subr.mxu0 0.0
      %1674 = vmatpush1.msra.mxu0 0.0
      %1675 = vmatprep.subr.mxu0 0.0
      %1676 = vmatpush1.msra.mxu0 0.0
      %1677 = vmatprep.subr.mxu0 0.0
      %1678 = vmatpush1.msra.mxu0 0.0
      %1679 = vmatprep.subr.mxu0 0.0
      %1680 = vmatpush1.msra.mxu0 0.0
      %1681 = vmatprep.subr.mxu0 0.0
      %1682 = vmatpush1.msra.mxu0 0.0
      %1683 = vmatprep.subr.mxu0 0.0
      %1684 = vmatpush1.msra.mxu0 0.0
      %1685 = vmatprep.subr.mxu0 0.0
      %1686 = vmatpush1.msra.mxu0 0.0
      %1687 = vmatprep.subr.mxu0 0.0
      %1688 = vmatpush1.msra.mxu0 0.0
      %1689 = vmatprep.subr.mxu0 0.0
      %1690 = vmatpush1.msra.mxu0 0.0
      %1691 = vmatprep.subr.mxu0 0.0
      %1692 = vmatpush1.msra.mxu0 0.0
      %1693 = vmatprep.subr.mxu0 0.0
      %1694 = vmatpush1.msra.mxu0 0.0
      %1695 = vmatprep.subr.mxu0 0.0
      %1696 = vmatpush1.msra.mxu0 0.0
      %1697 = vmatprep.subr.mxu0 0.0
      %1698 = vmatpush1.msra.mxu0 0.0
      %1699 = vmatprep.subr.mxu0 0.0
      %1700 = vmatpush1.msra.mxu0 0.0
      %1701 = vmatprep.subr.mxu0 0.0
      %1702 = vmatpush1.msra.mxu0 0.0
      %1703 = vmatprep.subr.mxu0 0.0
      %1704 = vmatpush1.msra.mxu0 0.0
      %1705 = vmatprep.subr.mxu0 0.0
      %1706 = vmatpush1.msra.mxu0 0.0
      %1707 = vmatprep.subr.mxu0 0.0
      %1708 = vmatpush1.msra.mxu0 0.0
      %1709 = vmatprep.mubr.f32.mxu0 0.0
      %1710 = vmatmul.mubr.f32.gmra.mrb[0].mxu0 %v1572
      %v1711 = vpop.f32.mrb[0].mxu0
      %v1712 = vadd.f32 %v1570, %v1711
      %v1713 = vpop.f32.mrb[0].mxu0
      %v1714 = vadd.f32 %v1570, %v1713
      %1715 = vdwg.mxu0
      %v1720 = vcombine.low %v1641, %v1643
      %v1721 = vcombine.low %v1712, %v1714
      %v1723 = vunpack.c.l.s4 1966171168
      %v1724 = vunpack.c.0.s8 %v1723
      %v1725 = vlaneseq
      %v1726 = vshrl.u32 %v1725, 7
      %v1727 = vsub.s32 %v1724, %v1726
      %v1728 = vrot.slane %v1720, %v1727
      %v1730 = vunpack.c.l.s4 1966171168
      %v1731 = vunpack.c.0.s8 %v1730
      %v1732 = vlaneseq
      %v1733 = vshrl.u32 %v1732, 7
      %v1734 = vsub.s32 %v1731, %v1733
      %v1735 = vrot.slane %v1721, %v1734
      %v1736 = vcombine.low %v1728, %v1735
      %v1738 = vunpack.c.l.s4 1966171168
      %v1739 = vunpack.c.0.s8 %v1738
      %v1740 = vlaneseq
      %v1741 = vshrl.u32 %v1740, 7
      %v1742 = vsub.s32 %v1739, %v1741
      %v1743 = vrot.slane %v1736, %v1742
      %v1745 = vlaneseq
      %vm1746 = vcmp.ge.s32.totalorder %v1745, 0
      %vm1747 = vcmp.lt.s32.totalorder %v1745, 512
      %vm1748 = vmand %vm1746, %vm1747
      %1749 = vst.msk [vmem:[%s253] sm:$0xf] %vm1748, %v1743
      %s1750 = smul.u32 4, %s19
      %p1751 = scmp.lt.s32.totalorder %s1750, 7
      %s1752 = scalar_select %p1751, %s1750, 7
      %s1753 = scalar_lea.vmem %s6, %s1752
      // Predicated region
      $region45: #{mlp_forward.1} parent=43 // pred_check
        %p1754 = pneg %p168
      $region46: #{mlp_forward.1} parent=43 // pred_check_branch
        %1756 = sbr.rel (%p1754) target = $region48
      $region47: #{mlp_forward.1} parent=43 // pred_region
        %s1757 = smul.u32 4, %s19
      $region48: #{mlp_forward.1} parent=43 // pred_fallthru
        _
    $region44: #{mlp_forward.1} parent=5 // pred_fallthru
      _
    %p1758 = scmp.le.s32.totalorder 2, %s14
    // Predicated region
    $region49: #{mlp_forward.1} parent=5 // pred_check
      %p1759 = pneg %p1758
    $region50: #{mlp_forward.1} parent=5 // pred_check_branch
      %1761 = sbr.rel (%p1759) target = $region52
    $region51: #{mlp_forward.1} parent=5 // pred_region
      %s1762 = ssub.s32 %s14, 2
      // Predicated region
      $region53: #{mlp_forward.1} parent=51 // pred_check
        %p1763 = pneg %p174
      $region54: #{mlp_forward.1} parent=51 // pred_check_branch
        %1765 = sbr.rel (%p1763) target = $region56
      $region55: #{mlp_forward.1} parent=51 // pred_region
        %s1766 = smul.u32 4, %s20
        %p1767 = scmp.lt.s32.totalorder %s1766, 7
        %s1768 = scalar_select %p1767, %s1766, 7
        %s1769 = scalar_lea.vmem %s6, %s1768
      $region56: #{mlp_forward.1} parent=51 // pred_fallthru
        _
    $region52: #{mlp_forward.1} parent=5 // pred_fallthru
      _
  $region6: #{mlp_forward.1} parent=0 // loop_footer
    %s18 = sadd.s32 1, %s14
  $region7: #{mlp_forward.1} parent=0 // loop_footer_branch
    %13 = sbr.rel target = $region3
  $region8: #{mlp_forward.1} parent=0 // loop_exit
    _

</llo_original>
